<compile_context>
chip_gen: v5e
topology: v5e:2x2
jax: 0.10.0
libtpu: 0.0.40
codegen_flags: <defaults>
</compile_context>

<pallas_src>
import functools

import jax
import jax.numpy as jnp
from jax import lax
from jax.experimental import pallas as pl
from jax.experimental.pallas import tpu as pltpu


def _round_up(x, m):
    return (x + m - 1) // m * m


# --------------------------- Pallas kernel ---------------------------

def _block_kernel(x_ref, m1_ref, m2_ref,
                  w1_ref, b1_ref,
                  w2a_ref, b2a_ref, w2b_ref, b2b_ref,
                  w3a_ref, b3a_ref, w3b_ref, b3b_ref,
                  rw_ref, o_ref, *, shifts1, shifts2):
    """One grid step processes NB whole images laid out as (C, NB*H*W)."""
    x = x_ref[...]            # (Cin_p, L)
    m1 = m1_ref[...]          # (9, L)  stride-1 tap border masks (0/1 float)
    m2 = m2_ref[...]          # (9, L)  dilation-2 tap border masks (0/1 float)

    def conv3x3(inp, masks, shifts, w_ref, b_ref):
        # 9 lane-rolled + masked copies of the input stacked along K, then a
        # single MXU matmul (Cout_p, 9*Cin_p) @ (9*Cin_p, L).
        taps = []
        for s, d in enumerate(shifts):
            if s == 4:                       # centre tap: no shift, always valid
                taps.append(inp)
            else:
                shifted = jnp.roll(inp, -d, axis=1)       # lane roll (XLU path)
                taps.append(shifted * masks[s:s + 1, :])  # zero the borders
        xk = jnp.concatenate(taps, axis=0)                # (9*Cin_p, L)
        y = jnp.dot(w_ref[...], xk, preferred_element_type=jnp.float32)
        return y + b_ref[...]                             # (Cout_p, L)

    # downsample = Conv3x3(pad=1) -> MaxPool3x3(stride=2, pad=1)
    y = conv3x3(x, m1, shifts1, w1_ref, b1_ref)           # (Cout_p, L)

    # Dense stride-1 3x3 max with border masking.  The stride-2 subsample is
    # done as a strided slice in the wrapper (layout plumbing, not compute).
    pooled = y                                            # centre tap is always valid
    for s, d in enumerate(shifts1):
        if s == 4:
            continue
        shifted = jnp.roll(y, -d, axis=1)
        pooled = jnp.maximum(pooled,
                             jnp.where(m1[s:s + 1, :] > 0.5, shifted, -1e30))
    y = pooled

    # Residual branches run at full resolution with taps dilated by 2, so the
    # even-pixel lattice (the pixels that survive the stride-2 subsample) sees
    # exactly the downsampled-resolution computation.  Odd pixels are discarded.
    def residual(inp, wa_ref, ba_ref, wb_ref, bb_ref):
        t = jnp.maximum(inp, 0.0)
        t = conv3x3(t, m2, shifts2, wa_ref, ba_ref)
        t = jnp.maximum(t, 0.0)
        return conv3x3(t, m2, shifts2, wb_ref, bb_ref)

    y = y + residual(y, w2a_ref, b2a_ref, w2b_ref, b2b_ref) * rw_ref[0]
    y = y + residual(y, w3a_ref, b3a_ref, w3b_ref, b3b_ref) * rw_ref[1]

    o_ref[...] = y.astype(o_ref.dtype)


# --------------------------- host-side glue ---------------------------

def _tap_masks(nb, H, W, dilation):
    """Flat lane shifts and (9, nb*H*W) 0/1 border-validity masks per tap."""
    P = H * W
    idx = jnp.arange(P, dtype=jnp.int32)
    h, w = idx // W, idx % W
    shifts, masks = [], []
    for dh in (-1, 0, 1):
        for dw in (-1, 0, 1):
            ddh, ddw = dh * dilation, dw * dilation
            valid = ((h + ddh >= 0) & (h + ddh < H) &
                     (w + ddw >= 0) & (w + ddw < W))
            shifts.append(ddh * W + ddw)                  # static python ints
            masks.append(valid.astype(jnp.float32))
    m = jnp.stack(masks, axis=0)                          # (9, P) per image
    return tuple(shifts), jnp.tile(m, (1, nb))            # same for each image


def _fuse_weight(w_oihw, cin_p, cout_p):
    """PyTorch (Cout, Cin, 3, 3) -> (Cout_p, 9*Cin_p), tap-major K, zero-padded."""
    cout, cin = w_oihw.shape[0], w_oihw.shape[1]
    w = jnp.transpose(w_oihw, (2, 3, 0, 1)).reshape(9, cout, cin)
    w = jnp.pad(w, ((0, 0), (0, cout_p - cout), (0, cin_p - cin)))
    return jnp.transpose(w, (1, 0, 2)).reshape(cout_p, 9 * cin_p)


def _pad_bias(b, cout_p):
    return jnp.pad(b, (0, cout_p - b.shape[0])).reshape(cout_p, 1)


def block_forward(x_nchw, params):
    N, cin, H, W = x_nchw.shape
    cout = params["w1"].shape[0]
    assert H % 2 == 0 and W % 2 == 0, "even spatial dims expected"
    P = H * W

    cin_p, cout_p = _round_up(cin, 8), _round_up(cout, 8)

    # Fold whole images into the lane dim (batch blocking).
    NB = N
    while NB > 1 and (NB * P > 2048 or N % NB != 0):
        NB -= 1
    L, G = NB * P, N // NB

    # (N, Cin, H, W) -> (Cin_p, N*H*W): channels on sublanes, lane-dense spatial.
    x = jnp.transpose(x_nchw, (1, 0, 2, 3)).reshape(cin, N * P)
    x = jnp.pad(x.astype(jnp.float32), ((0, cin_p - cin), (0, 0)))

    shifts1, mask1 = _tap_masks(NB, H, W, dilation=1)
    shifts2, mask2 = _tap_masks(NB, H, W, dilation=2)

    w1 = _fuse_weight(params["w1"], cin_p, cout_p)
    w2a = _fuse_weight(params["w2a"], cout_p, cout_p)
    w2b = _fuse_weight(params["w2b"], cout_p, cout_p)
    w3a = _fuse_weight(params["w3a"], cout_p, cout_p)
    w3b = _fuse_weight(params["w3b"], cout_p, cout_p)
    b1 = _pad_bias(params["b1"], cout_p)
    b2a = _pad_bias(params["b2a"], cout_p)
    b2b = _pad_bias(params["b2b"], cout_p)
    b3a = _pad_bias(params["b3a"], cout_p)
    b3b = _pad_bias(params["b3b"], cout_p)

    def const_spec(shape):
        return pl.BlockSpec(shape, lambda g: (0,) * len(shape))

    in_specs = [
        pl.BlockSpec((cin_p, L), lambda g: (0, g)),           # x (NB images / step)
        const_spec((9, L)), const_spec((9, L)),               # tap masks
        const_spec((cout_p, 9 * cin_p)), const_spec((cout_p, 1)),
        const_spec((cout_p, 9 * cout_p)), const_spec((cout_p, 1)),
        const_spec((cout_p, 9 * cout_p)), const_spec((cout_p, 1)),
        const_spec((cout_p, 9 * cout_p)), const_spec((cout_p, 1)),
        const_spec((cout_p, 9 * cout_p)), const_spec((cout_p, 1)),
        pl.BlockSpec(memory_space=pltpu.MemorySpace.SMEM),    # reweights (2,)
    ]
    out_specs = pl.BlockSpec((cout_p, L), lambda g: (0, g))

    kernel = functools.partial(_block_kernel, shifts1=shifts1, shifts2=shifts2)
    out = pl.pallas_call(
        kernel,
        out_shape=jax.ShapeDtypeStruct((cout_p, N * P), jnp.float32),
        grid=(G,),
        in_specs=in_specs,
        out_specs=out_specs,
        compiler_params=pltpu.CompilerParams(
            dimension_semantics=("parallel",)),
    )(
        x, mask1, mask2,
        w1, b1, w2a, b2a, w2b, b2b, w3a, b3a, w3b, b3b,
        params["reweights"].astype(jnp.float32),
    )

    # Drop channel padding, undo flattening, apply the stride-2 pool subsample
    # (pure layout plumbing outside the kernel), return NCHW.
    out = out[:cout].reshape(cout, N, H, W)[:, :, ::2, ::2]
    return jnp.transpose(out, (1, 0, 2, 3))


# --------------------------- params & pure-JAX reference ---------------------------

def init_params(key, in_channels, out_channels):
    ks = jax.random.split(key, 10)

    def w(k, cin, cout):
        return 0.1 * jax.random.normal(k, (cout, cin, 3, 3), jnp.float32)

    def b(k, cout):
        return 0.1 * jax.random.normal(k, (cout,), jnp.float32)

    return {
        "w1": w(ks[0], in_channels, out_channels), "b1": b(ks[1], out_channels),
        "w2a": w(ks[2], out_channels, out_channels), "b2a": b(ks[3], out_channels),
        "w2b": w(ks[4], out_channels, out_channels), "b2b": b(ks[5], out_channels),
        "w3a": w(ks[6], out_channels, out_channels), "b3a": b(ks[7], out_channels),
        "w3b": w(ks[8], out_channels, out_channels), "b3b": b(ks[9], out_channels),
        # PyTorch initialises reweights = zeros(2); use nonzero values here so
        # the residual branches actually contribute in this synthetic test.
        "reweights": jnp.array([0.5, -0.25], jnp.float32),
    }


def ref_forward(x, p):
    def conv(x, w, b):
        y = lax.conv_general_dilated(
            x, w, window_strides=(1, 1), padding=((1, 1), (1, 1)),
            dimension_numbers=("NCHW", "OIHW", "NCHW"),
            precision=lax.Precision.HIGHEST)
        return y + b[None, :, None, None]

    def maxpool(x):
        return lax.reduce_window(
            x, -jnp.inf, lax.max,
            window_dimensions=(1, 1, 3, 3), window_strides=(1, 1, 2, 2),
            padding=((0, 0), (0, 0), (1, 1), (1, 1)))

    def res(y, wa, ba, wb, bb):
        t = jax.nn.relu(y)
        t = conv(t, wa, ba)
        t = jax.nn.relu(t)
        return conv(t, wb, bb)

    y = maxpool(conv(x, p["w1"], p["b1"]))
    y = y + res(y, p["w2a"], p["b2a"], p["w2b"], p["b2b"]) * p["reweights"][0]
    y = y + res(y, p["w3a"], p["b3a"], p["w3b"], p["b3b"]) * p["reweights"][1]
    return y


if __name__ == "__main__":
    key = jax.random.PRNGKey(0)
    kx, kp = jax.random.split(key)
    N, CIN, COUT, H, W = 2, 4, 8, 16, 16

    x = jax.random.normal(kx, (N, CIN, H, W), jnp.float32)
    params = init_params(kp, CIN, COUT)

    out = jax.block_until_ready(block_forward(x, params))
    ref = jax.block_until_ready(ref_forward(x, params))

    assert out.shape == (N, COUT, H // 2, W // 2), out.shape
    max_err = float(jnp.max(jnp.abs(out - ref)))
    if max_err > 1e-3:
        raise AssertionError(f"kernel/reference mismatch, max abs err = {max_err}")
    print("KERNEL_OK")
</pallas_src>

<mosaic_0001>
module attributes {stable_mosaic.version = 11 : i64} {
  func.func @_block_kernel(%arg0: i32, %arg1: memref<8x512xf32, #tpu.memory_space<vmem>>, %arg2: memref<9x512xf32, #tpu.memory_space<vmem>>, %arg3: memref<9x512xf32, #tpu.memory_space<vmem>>, %arg4: memref<8x72xf32, #tpu.memory_space<vmem>>, %arg5: memref<8x1xf32, #tpu.memory_space<vmem>>, %arg6: memref<8x72xf32, #tpu.memory_space<vmem>>, %arg7: memref<8x1xf32, #tpu.memory_space<vmem>>, %arg8: memref<8x72xf32, #tpu.memory_space<vmem>>, %arg9: memref<8x1xf32, #tpu.memory_space<vmem>>, %arg10: memref<8x72xf32, #tpu.memory_space<vmem>>, %arg11: memref<8x1xf32, #tpu.memory_space<vmem>>, %arg12: memref<8x72xf32, #tpu.memory_space<vmem>>, %arg13: memref<8x1xf32, #tpu.memory_space<vmem>>, %arg14: memref<2xf32, #tpu.memory_space<smem>>, %arg15: memref<8x512xf32, #tpu.memory_space<vmem>>) attributes {dimension_semantics = [#tpu.dimension_semantics<parallel>], iteration_bounds = array<i64: 1>, scalar_prefetch = 0 : i64, scratch_operands = 0 : i64, tpu.core_type = #tpu.core_type<tc>, window_params = [{transform_indices = @transform_0, window_bounds = array<i64: 8, 512>}, {pipeline_mode = #tpu.pipeline_mode<synchronous>, transform_indices = @transform_1, window_bounds = array<i64: 9, 512>}, {pipeline_mode = #tpu.pipeline_mode<synchronous>, transform_indices = @transform_2, window_bounds = array<i64: 9, 512>}, {pipeline_mode = #tpu.pipeline_mode<synchronous>, transform_indices = @transform_3, window_bounds = array<i64: 8, 72>}, {pipeline_mode = #tpu.pipeline_mode<synchronous>, transform_indices = @transform_4, window_bounds = array<i64: 8, 1>}, {pipeline_mode = #tpu.pipeline_mode<synchronous>, transform_indices = @transform_5, window_bounds = array<i64: 8, 72>}, {pipeline_mode = #tpu.pipeline_mode<synchronous>, transform_indices = @transform_6, window_bounds = array<i64: 8, 1>}, {pipeline_mode = #tpu.pipeline_mode<synchronous>, transform_indices = @transform_7, window_bounds = array<i64: 8, 72>}, {pipeline_mode = #tpu.pipeline_mode<synchronous>, transform_indices = @transform_8, window_bounds = array<i64: 8, 1>}, {pipeline_mode = #tpu.pipeline_mode<synchronous>, transform_indices = @transform_9, window_bounds = array<i64: 8, 72>}, {pipeline_mode = #tpu.pipeline_mode<synchronous>, transform_indices = @transform_10, window_bounds = array<i64: 8, 1>}, {pipeline_mode = #tpu.pipeline_mode<synchronous>, transform_indices = @transform_11, window_bounds = array<i64: 8, 72>}, {pipeline_mode = #tpu.pipeline_mode<synchronous>, transform_indices = @transform_12, window_bounds = array<i64: 8, 1>}, {transform_indices = @transform_13, window_bounds = array<i64: 2>}, {transform_indices = @transform_14, window_bounds = array<i64: 8, 512>}]} {
    %c0 = arith.constant 0 : index
    %c0_0 = arith.constant 0 : index
    %0 = vector.load %arg1[%c0, %c0_0] : memref<8x512xf32, #tpu.memory_space<vmem>>, vector<8x512xf32>
    %c0_1 = arith.constant 0 : index
    %c0_2 = arith.constant 0 : index
    %1 = vector.load %arg2[%c0_1, %c0_2] : memref<9x512xf32, #tpu.memory_space<vmem>>, vector<9x512xf32>
    %c0_3 = arith.constant 0 : index
    %c0_4 = arith.constant 0 : index
    %2 = vector.load %arg3[%c0_3, %c0_4] : memref<9x512xf32, #tpu.memory_space<vmem>>, vector<9x512xf32>
    %3 = vector.extract_strided_slice %0 {offsets = [0, 495], sizes = [8, 17], strides = [1, 1]} : vector<8x512xf32> to vector<8x17xf32>
    %4 = vector.extract_strided_slice %0 {offsets = [0, 0], sizes = [8, 495], strides = [1, 1]} : vector<8x512xf32> to vector<8x495xf32>
    %5 = tpu.concatenate %3, %4 in 1 : vector<8x17xf32>, vector<8x495xf32> -> vector<8x512xf32>
    %6 = vector.extract_strided_slice %1 {offsets = [0, 0], sizes = [1, 512], strides = [1, 1]} : vector<9x512xf32> to vector<1x512xf32>
    %7 = vector.broadcast %6 : vector<1x512xf32> to vector<8x512xf32>
    %8 = arith.mulf %5, %7 : vector<8x512xf32>
    %9 = vector.extract_strided_slice %0 {offsets = [0, 496], sizes = [8, 16], strides = [1, 1]} : vector<8x512xf32> to vector<8x16xf32>
    %10 = vector.extract_strided_slice %0 {offsets = [0, 0], sizes = [8, 496], strides = [1, 1]} : vector<8x512xf32> to vector<8x496xf32>
    %11 = tpu.concatenate %9, %10 in 1 : vector<8x16xf32>, vector<8x496xf32> -> vector<8x512xf32>
    %12 = vector.extract_strided_slice %1 {offsets = [1, 0], sizes = [1, 512], strides = [1, 1]} : vector<9x512xf32> to vector<1x512xf32>
    %13 = vector.broadcast %12 : vector<1x512xf32> to vector<8x512xf32>
    %14 = arith.mulf %11, %13 : vector<8x512xf32>
    %15 = vector.extract_strided_slice %0 {offsets = [0, 497], sizes = [8, 15], strides = [1, 1]} : vector<8x512xf32> to vector<8x15xf32>
    %16 = vector.extract_strided_slice %0 {offsets = [0, 0], sizes = [8, 497], strides = [1, 1]} : vector<8x512xf32> to vector<8x497xf32>
    %17 = tpu.concatenate %15, %16 in 1 : vector<8x15xf32>, vector<8x497xf32> -> vector<8x512xf32>
    %18 = vector.extract_strided_slice %1 {offsets = [2, 0], sizes = [1, 512], strides = [1, 1]} : vector<9x512xf32> to vector<1x512xf32>
    %19 = vector.broadcast %18 : vector<1x512xf32> to vector<8x512xf32>
    %20 = arith.mulf %17, %19 : vector<8x512xf32>
    %21 = vector.extract_strided_slice %0 {offsets = [0, 511], sizes = [8, 1], strides = [1, 1]} : vector<8x512xf32> to vector<8x1xf32>
    %22 = vector.extract_strided_slice %0 {offsets = [0, 0], sizes = [8, 511], strides = [1, 1]} : vector<8x512xf32> to vector<8x511xf32>
    %23 = tpu.concatenate %21, %22 in 1 : vector<8x1xf32>, vector<8x511xf32> -> vector<8x512xf32>
    %24 = vector.extract_strided_slice %1 {offsets = [3, 0], sizes = [1, 512], strides = [1, 1]} : vector<9x512xf32> to vector<1x512xf32>
    %25 = vector.broadcast %24 : vector<1x512xf32> to vector<8x512xf32>
    %26 = arith.mulf %23, %25 : vector<8x512xf32>
    %27 = vector.extract_strided_slice %0 {offsets = [0, 1], sizes = [8, 511], strides = [1, 1]} : vector<8x512xf32> to vector<8x511xf32>
    %28 = vector.extract_strided_slice %0 {offsets = [0, 0], sizes = [8, 1], strides = [1, 1]} : vector<8x512xf32> to vector<8x1xf32>
    %29 = tpu.concatenate %27, %28 in 1 : vector<8x511xf32>, vector<8x1xf32> -> vector<8x512xf32>
    %30 = vector.extract_strided_slice %1 {offsets = [5, 0], sizes = [1, 512], strides = [1, 1]} : vector<9x512xf32> to vector<1x512xf32>
    %31 = vector.broadcast %30 : vector<1x512xf32> to vector<8x512xf32>
    %32 = arith.mulf %29, %31 : vector<8x512xf32>
    %33 = vector.extract_strided_slice %0 {offsets = [0, 15], sizes = [8, 497], strides = [1, 1]} : vector<8x512xf32> to vector<8x497xf32>
    %34 = vector.extract_strided_slice %0 {offsets = [0, 0], sizes = [8, 15], strides = [1, 1]} : vector<8x512xf32> to vector<8x15xf32>
    %35 = tpu.concatenate %33, %34 in 1 : vector<8x497xf32>, vector<8x15xf32> -> vector<8x512xf32>
    %36 = vector.extract_strided_slice %1 {offsets = [6, 0], sizes = [1, 512], strides = [1, 1]} : vector<9x512xf32> to vector<1x512xf32>
    %37 = vector.broadcast %36 : vector<1x512xf32> to vector<8x512xf32>
    %38 = arith.mulf %35, %37 : vector<8x512xf32>
    %39 = vector.extract_strided_slice %0 {offsets = [0, 16], sizes = [8, 496], strides = [1, 1]} : vector<8x512xf32> to vector<8x496xf32>
    %40 = vector.extract_strided_slice %0 {offsets = [0, 0], sizes = [8, 16], strides = [1, 1]} : vector<8x512xf32> to vector<8x16xf32>
    %41 = tpu.concatenate %39, %40 in 1 : vector<8x496xf32>, vector<8x16xf32> -> vector<8x512xf32>
    %42 = vector.extract_strided_slice %1 {offsets = [7, 0], sizes = [1, 512], strides = [1, 1]} : vector<9x512xf32> to vector<1x512xf32>
    %43 = vector.broadcast %42 : vector<1x512xf32> to vector<8x512xf32>
    %44 = arith.mulf %41, %43 : vector<8x512xf32>
    %45 = vector.extract_strided_slice %0 {offsets = [0, 17], sizes = [8, 495], strides = [1, 1]} : vector<8x512xf32> to vector<8x495xf32>
    %46 = vector.extract_strided_slice %0 {offsets = [0, 0], sizes = [8, 17], strides = [1, 1]} : vector<8x512xf32> to vector<8x17xf32>
    %47 = tpu.concatenate %45, %46 in 1 : vector<8x495xf32>, vector<8x17xf32> -> vector<8x512xf32>
    %48 = vector.extract_strided_slice %1 {offsets = [8, 0], sizes = [1, 512], strides = [1, 1]} : vector<9x512xf32> to vector<1x512xf32>
    %49 = vector.broadcast %48 : vector<1x512xf32> to vector<8x512xf32>
    %50 = arith.mulf %47, %49 : vector<8x512xf32>
    %51 = tpu.concatenate %8, %14, %20, %26, %0, %32, %38, %44, %50 in 0 : vector<8x512xf32>, vector<8x512xf32>, vector<8x512xf32>, vector<8x512xf32>, vector<8x512xf32>, vector<8x512xf32>, vector<8x512xf32>, vector<8x512xf32>, vector<8x512xf32> -> vector<72x512xf32>
    %c0_5 = arith.constant 0 : index
    %c0_6 = arith.constant 0 : index
    %52 = vector.load %arg4[%c0_5, %c0_6] : memref<8x72xf32, #tpu.memory_space<vmem>>, vector<8x72xf32>
    %cst = arith.constant dense<0.000000e+00> : vector<8x512xf32>
    %53 = tpu.matmul %52, %51, %cst {dimension_numbers = #tpu.dot_dimension_numbers<[1], [0], [0], [1], [0, 0, 1, 1], [], []>} : vector<8x72xf32>, vector<72x512xf32>, vector<8x512xf32> -> vector<8x512xf32>
    %c0_7 = arith.constant 0 : index
    %c0_8 = arith.constant 0 : index
    %54 = vector.load %arg5[%c0_7, %c0_8] : memref<8x1xf32, #tpu.memory_space<vmem>>, vector<8x1xf32>
    %55 = vector.broadcast %54 : vector<8x1xf32> to vector<8x512xf32>
    %56 = arith.addf %53, %55 : vector<8x512xf32>
    %57 = vector.extract_strided_slice %56 {offsets = [0, 495], sizes = [8, 17], strides = [1, 1]} : vector<8x512xf32> to vector<8x17xf32>
    %58 = vector.extract_strided_slice %56 {offsets = [0, 0], sizes = [8, 495], strides = [1, 1]} : vector<8x512xf32> to vector<8x495xf32>
    %59 = tpu.concatenate %57, %58 in 1 : vector<8x17xf32>, vector<8x495xf32> -> vector<8x512xf32>
    %60 = vector.extract_strided_slice %1 {offsets = [0, 0], sizes = [1, 512], strides = [1, 1]} : vector<9x512xf32> to vector<1x512xf32>
    %cst_9 = arith.constant 5.000000e-01 : f32
    %61 = vector.broadcast %cst_9 : f32 to vector<1x512xf32>
    %62 = arith.cmpf ogt, %60, %61 : vector<1x512xf32>
    %cst_10 = arith.constant -1.000000e+30 : f32
    %63 = vector.shape_cast %62 : vector<1x512xi1> to vector<1x512xi1>
    %64 = vector.broadcast %63 : vector<1x512xi1> to vector<8x512xi1>
    %65 = vector.broadcast %cst_10 : f32 to vector<8x512xf32>
    %66 = arith.select %64, %59, %65 : vector<8x512xi1>, vector<8x512xf32>
    %67 = arith.maximumf %56, %66 : vector<8x512xf32>
    %68 = vector.extract_strided_slice %56 {offsets = [0, 496], sizes = [8, 16], strides = [1, 1]} : vector<8x512xf32> to vector<8x16xf32>
    %69 = vector.extract_strided_slice %56 {offsets = [0, 0], sizes = [8, 496], strides = [1, 1]} : vector<8x512xf32> to vector<8x496xf32>
    %70 = tpu.concatenate %68, %69 in 1 : vector<8x16xf32>, vector<8x496xf32> -> vector<8x512xf32>
    %71 = vector.extract_strided_slice %1 {offsets = [1, 0], sizes = [1, 512], strides = [1, 1]} : vector<9x512xf32> to vector<1x512xf32>
    %cst_11 = arith.constant 5.000000e-01 : f32
    %72 = vector.broadcast %cst_11 : f32 to vector<1x512xf32>
    %73 = arith.cmpf ogt, %71, %72 : vector<1x512xf32>
    %cst_12 = arith.constant -1.000000e+30 : f32
    %74 = vector.shape_cast %73 : vector<1x512xi1> to vector<1x512xi1>
    %75 = vector.broadcast %74 : vector<1x512xi1> to vector<8x512xi1>
    %76 = vector.broadcast %cst_12 : f32 to vector<8x512xf32>
    %77 = arith.select %75, %70, %76 : vector<8x512xi1>, vector<8x512xf32>
    %78 = arith.maximumf %67, %77 : vector<8x512xf32>
    %79 = vector.extract_strided_slice %56 {offsets = [0, 497], sizes = [8, 15], strides = [1, 1]} : vector<8x512xf32> to vector<8x15xf32>
    %80 = vector.extract_strided_slice %56 {offsets = [0, 0], sizes = [8, 497], strides = [1, 1]} : vector<8x512xf32> to vector<8x497xf32>
    %81 = tpu.concatenate %79, %80 in 1 : vector<8x15xf32>, vector<8x497xf32> -> vector<8x512xf32>
    %82 = vector.extract_strided_slice %1 {offsets = [2, 0], sizes = [1, 512], strides = [1, 1]} : vector<9x512xf32> to vector<1x512xf32>
    %cst_13 = arith.constant 5.000000e-01 : f32
    %83 = vector.broadcast %cst_13 : f32 to vector<1x512xf32>
    %84 = arith.cmpf ogt, %82, %83 : vector<1x512xf32>
    %cst_14 = arith.constant -1.000000e+30 : f32
    %85 = vector.shape_cast %84 : vector<1x512xi1> to vector<1x512xi1>
    %86 = vector.broadcast %85 : vector<1x512xi1> to vector<8x512xi1>
    %87 = vector.broadcast %cst_14 : f32 to vector<8x512xf32>
    %88 = arith.select %86, %81, %87 : vector<8x512xi1>, vector<8x512xf32>
    %89 = arith.maximumf %78, %88 : vector<8x512xf32>
    %90 = vector.extract_strided_slice %56 {offsets = [0, 511], sizes = [8, 1], strides = [1, 1]} : vector<8x512xf32> to vector<8x1xf32>
    %91 = vector.extract_strided_slice %56 {offsets = [0, 0], sizes = [8, 511], strides = [1, 1]} : vector<8x512xf32> to vector<8x511xf32>
    %92 = tpu.concatenate %90, %91 in 1 : vector<8x1xf32>, vector<8x511xf32> -> vector<8x512xf32>
    %93 = vector.extract_strided_slice %1 {offsets = [3, 0], sizes = [1, 512], strides = [1, 1]} : vector<9x512xf32> to vector<1x512xf32>
    %cst_15 = arith.constant 5.000000e-01 : f32
    %94 = vector.broadcast %cst_15 : f32 to vector<1x512xf32>
    %95 = arith.cmpf ogt, %93, %94 : vector<1x512xf32>
    %cst_16 = arith.constant -1.000000e+30 : f32
    %96 = vector.shape_cast %95 : vector<1x512xi1> to vector<1x512xi1>
    %97 = vector.broadcast %96 : vector<1x512xi1> to vector<8x512xi1>
    %98 = vector.broadcast %cst_16 : f32 to vector<8x512xf32>
    %99 = arith.select %97, %92, %98 : vector<8x512xi1>, vector<8x512xf32>
    %100 = arith.maximumf %89, %99 : vector<8x512xf32>
    %101 = vector.extract_strided_slice %56 {offsets = [0, 1], sizes = [8, 511], strides = [1, 1]} : vector<8x512xf32> to vector<8x511xf32>
    %102 = vector.extract_strided_slice %56 {offsets = [0, 0], sizes = [8, 1], strides = [1, 1]} : vector<8x512xf32> to vector<8x1xf32>
    %103 = tpu.concatenate %101, %102 in 1 : vector<8x511xf32>, vector<8x1xf32> -> vector<8x512xf32>
    %104 = vector.extract_strided_slice %1 {offsets = [5, 0], sizes = [1, 512], strides = [1, 1]} : vector<9x512xf32> to vector<1x512xf32>
    %cst_17 = arith.constant 5.000000e-01 : f32
    %105 = vector.broadcast %cst_17 : f32 to vector<1x512xf32>
    %106 = arith.cmpf ogt, %104, %105 : vector<1x512xf32>
    %cst_18 = arith.constant -1.000000e+30 : f32
    %107 = vector.shape_cast %106 : vector<1x512xi1> to vector<1x512xi1>
    %108 = vector.broadcast %107 : vector<1x512xi1> to vector<8x512xi1>
    %109 = vector.broadcast %cst_18 : f32 to vector<8x512xf32>
    %110 = arith.select %108, %103, %109 : vector<8x512xi1>, vector<8x512xf32>
    %111 = arith.maximumf %100, %110 : vector<8x512xf32>
    %112 = vector.extract_strided_slice %56 {offsets = [0, 15], sizes = [8, 497], strides = [1, 1]} : vector<8x512xf32> to vector<8x497xf32>
    %113 = vector.extract_strided_slice %56 {offsets = [0, 0], sizes = [8, 15], strides = [1, 1]} : vector<8x512xf32> to vector<8x15xf32>
    %114 = tpu.concatenate %112, %113 in 1 : vector<8x497xf32>, vector<8x15xf32> -> vector<8x512xf32>
    %115 = vector.extract_strided_slice %1 {offsets = [6, 0], sizes = [1, 512], strides = [1, 1]} : vector<9x512xf32> to vector<1x512xf32>
    %cst_19 = arith.constant 5.000000e-01 : f32
    %116 = vector.broadcast %cst_19 : f32 to vector<1x512xf32>
    %117 = arith.cmpf ogt, %115, %116 : vector<1x512xf32>
    %cst_20 = arith.constant -1.000000e+30 : f32
    %118 = vector.shape_cast %117 : vector<1x512xi1> to vector<1x512xi1>
    %119 = vector.broadcast %118 : vector<1x512xi1> to vector<8x512xi1>
    %120 = vector.broadcast %cst_20 : f32 to vector<8x512xf32>
    %121 = arith.select %119, %114, %120 : vector<8x512xi1>, vector<8x512xf32>
    %122 = arith.maximumf %111, %121 : vector<8x512xf32>
    %123 = vector.extract_strided_slice %56 {offsets = [0, 16], sizes = [8, 496], strides = [1, 1]} : vector<8x512xf32> to vector<8x496xf32>
    %124 = vector.extract_strided_slice %56 {offsets = [0, 0], sizes = [8, 16], strides = [1, 1]} : vector<8x512xf32> to vector<8x16xf32>
    %125 = tpu.concatenate %123, %124 in 1 : vector<8x496xf32>, vector<8x16xf32> -> vector<8x512xf32>
    %126 = vector.extract_strided_slice %1 {offsets = [7, 0], sizes = [1, 512], strides = [1, 1]} : vector<9x512xf32> to vector<1x512xf32>
    %cst_21 = arith.constant 5.000000e-01 : f32
    %127 = vector.broadcast %cst_21 : f32 to vector<1x512xf32>
    %128 = arith.cmpf ogt, %126, %127 : vector<1x512xf32>
    %cst_22 = arith.constant -1.000000e+30 : f32
    %129 = vector.shape_cast %128 : vector<1x512xi1> to vector<1x512xi1>
    %130 = vector.broadcast %129 : vector<1x512xi1> to vector<8x512xi1>
    %131 = vector.broadcast %cst_22 : f32 to vector<8x512xf32>
    %132 = arith.select %130, %125, %131 : vector<8x512xi1>, vector<8x512xf32>
    %133 = arith.maximumf %122, %132 : vector<8x512xf32>
    %134 = vector.extract_strided_slice %56 {offsets = [0, 17], sizes = [8, 495], strides = [1, 1]} : vector<8x512xf32> to vector<8x495xf32>
    %135 = vector.extract_strided_slice %56 {offsets = [0, 0], sizes = [8, 17], strides = [1, 1]} : vector<8x512xf32> to vector<8x17xf32>
    %136 = tpu.concatenate %134, %135 in 1 : vector<8x495xf32>, vector<8x17xf32> -> vector<8x512xf32>
    %137 = vector.extract_strided_slice %1 {offsets = [8, 0], sizes = [1, 512], strides = [1, 1]} : vector<9x512xf32> to vector<1x512xf32>
    %cst_23 = arith.constant 5.000000e-01 : f32
    %138 = vector.broadcast %cst_23 : f32 to vector<1x512xf32>
    %139 = arith.cmpf ogt, %137, %138 : vector<1x512xf32>
    %cst_24 = arith.constant -1.000000e+30 : f32
    %140 = vector.shape_cast %139 : vector<1x512xi1> to vector<1x512xi1>
    %141 = vector.broadcast %140 : vector<1x512xi1> to vector<8x512xi1>
    %142 = vector.broadcast %cst_24 : f32 to vector<8x512xf32>
    %143 = arith.select %141, %136, %142 : vector<8x512xi1>, vector<8x512xf32>
    %144 = arith.maximumf %133, %143 : vector<8x512xf32>
    %cst_25 = arith.constant 0.000000e+00 : f32
    %145 = vector.broadcast %cst_25 : f32 to vector<8x512xf32>
    %146 = arith.maximumf %144, %145 : vector<8x512xf32>
    %147 = vector.extract_strided_slice %146 {offsets = [0, 478], sizes = [8, 34], strides = [1, 1]} : vector<8x512xf32> to vector<8x34xf32>
    %148 = vector.extract_strided_slice %146 {offsets = [0, 0], sizes = [8, 478], strides = [1, 1]} : vector<8x512xf32> to vector<8x478xf32>
    %149 = tpu.concatenate %147, %148 in 1 : vector<8x34xf32>, vector<8x478xf32> -> vector<8x512xf32>
    %150 = vector.extract_strided_slice %2 {offsets = [0, 0], sizes = [1, 512], strides = [1, 1]} : vector<9x512xf32> to vector<1x512xf32>
    %151 = vector.broadcast %150 : vector<1x512xf32> to vector<8x512xf32>
    %152 = arith.mulf %149, %151 : vector<8x512xf32>
    %153 = vector.extract_strided_slice %146 {offsets = [0, 480], sizes = [8, 32], strides = [1, 1]} : vector<8x512xf32> to vector<8x32xf32>
    %154 = vector.extract_strided_slice %146 {offsets = [0, 0], sizes = [8, 480], strides = [1, 1]} : vector<8x512xf32> to vector<8x480xf32>
    %155 = tpu.concatenate %153, %154 in 1 : vector<8x32xf32>, vector<8x480xf32> -> vector<8x512xf32>
    %156 = vector.extract_strided_slice %2 {offsets = [1, 0], sizes = [1, 512], strides = [1, 1]} : vector<9x512xf32> to vector<1x512xf32>
    %157 = vector.broadcast %156 : vector<1x512xf32> to vector<8x512xf32>
    %158 = arith.mulf %155, %157 : vector<8x512xf32>
    %159 = vector.extract_strided_slice %146 {offsets = [0, 482], sizes = [8, 30], strides = [1, 1]} : vector<8x512xf32> to vector<8x30xf32>
    %160 = vector.extract_strided_slice %146 {offsets = [0, 0], sizes = [8, 482], strides = [1, 1]} : vector<8x512xf32> to vector<8x482xf32>
    %161 = tpu.concatenate %159, %160 in 1 : vector<8x30xf32>, vector<8x482xf32> -> vector<8x512xf32>
    %162 = vector.extract_strided_slice %2 {offsets = [2, 0], sizes = [1, 512], strides = [1, 1]} : vector<9x512xf32> to vector<1x512xf32>
    %163 = vector.broadcast %162 : vector<1x512xf32> to vector<8x512xf32>
    %164 = arith.mulf %161, %163 : vector<8x512xf32>
    %165 = vector.extract_strided_slice %146 {offsets = [0, 510], sizes = [8, 2], strides = [1, 1]} : vector<8x512xf32> to vector<8x2xf32>
    %166 = vector.extract_strided_slice %146 {offsets = [0, 0], sizes = [8, 510], strides = [1, 1]} : vector<8x512xf32> to vector<8x510xf32>
    %167 = tpu.concatenate %165, %166 in 1 : vector<8x2xf32>, vector<8x510xf32> -> vector<8x512xf32>
    %168 = vector.extract_strided_slice %2 {offsets = [3, 0], sizes = [1, 512], strides = [1, 1]} : vector<9x512xf32> to vector<1x512xf32>
    %169 = vector.broadcast %168 : vector<1x512xf32> to vector<8x512xf32>
    %170 = arith.mulf %167, %169 : vector<8x512xf32>
    %171 = vector.extract_strided_slice %146 {offsets = [0, 2], sizes = [8, 510], strides = [1, 1]} : vector<8x512xf32> to vector<8x510xf32>
    %172 = vector.extract_strided_slice %146 {offsets = [0, 0], sizes = [8, 2], strides = [1, 1]} : vector<8x512xf32> to vector<8x2xf32>
    %173 = tpu.concatenate %171, %172 in 1 : vector<8x510xf32>, vector<8x2xf32> -> vector<8x512xf32>
    %174 = vector.extract_strided_slice %2 {offsets = [5, 0], sizes = [1, 512], strides = [1, 1]} : vector<9x512xf32> to vector<1x512xf32>
    %175 = vector.broadcast %174 : vector<1x512xf32> to vector<8x512xf32>
    %176 = arith.mulf %173, %175 : vector<8x512xf32>
    %177 = vector.extract_strided_slice %146 {offsets = [0, 30], sizes = [8, 482], strides = [1, 1]} : vector<8x512xf32> to vector<8x482xf32>
    %178 = vector.extract_strided_slice %146 {offsets = [0, 0], sizes = [8, 30], strides = [1, 1]} : vector<8x512xf32> to vector<8x30xf32>
    %179 = tpu.concatenate %177, %178 in 1 : vector<8x482xf32>, vector<8x30xf32> -> vector<8x512xf32>
    %180 = vector.extract_strided_slice %2 {offsets = [6, 0], sizes = [1, 512], strides = [1, 1]} : vector<9x512xf32> to vector<1x512xf32>
    %181 = vector.broadcast %180 : vector<1x512xf32> to vector<8x512xf32>
    %182 = arith.mulf %179, %181 : vector<8x512xf32>
    %183 = vector.extract_strided_slice %146 {offsets = [0, 32], sizes = [8, 480], strides = [1, 1]} : vector<8x512xf32> to vector<8x480xf32>
    %184 = vector.extract_strided_slice %146 {offsets = [0, 0], sizes = [8, 32], strides = [1, 1]} : vector<8x512xf32> to vector<8x32xf32>
    %185 = tpu.concatenate %183, %184 in 1 : vector<8x480xf32>, vector<8x32xf32> -> vector<8x512xf32>
    %186 = vector.extract_strided_slice %2 {offsets = [7, 0], sizes = [1, 512], strides = [1, 1]} : vector<9x512xf32> to vector<1x512xf32>
    %187 = vector.broadcast %186 : vector<1x512xf32> to vector<8x512xf32>
    %188 = arith.mulf %185, %187 : vector<8x512xf32>
    %189 = vector.extract_strided_slice %146 {offsets = [0, 34], sizes = [8, 478], strides = [1, 1]} : vector<8x512xf32> to vector<8x478xf32>
    %190 = vector.extract_strided_slice %146 {offsets = [0, 0], sizes = [8, 34], strides = [1, 1]} : vector<8x512xf32> to vector<8x34xf32>
    %191 = tpu.concatenate %189, %190 in 1 : vector<8x478xf32>, vector<8x34xf32> -> vector<8x512xf32>
    %192 = vector.extract_strided_slice %2 {offsets = [8, 0], sizes = [1, 512], strides = [1, 1]} : vector<9x512xf32> to vector<1x512xf32>
    %193 = vector.broadcast %192 : vector<1x512xf32> to vector<8x512xf32>
    %194 = arith.mulf %191, %193 : vector<8x512xf32>
    %195 = tpu.concatenate %152, %158, %164, %170, %146, %176, %182, %188, %194 in 0 : vector<8x512xf32>, vector<8x512xf32>, vector<8x512xf32>, vector<8x512xf32>, vector<8x512xf32>, vector<8x512xf32>, vector<8x512xf32>, vector<8x512xf32>, vector<8x512xf32> -> vector<72x512xf32>
    %c0_26 = arith.constant 0 : index
    %c0_27 = arith.constant 0 : index
    %196 = vector.load %arg6[%c0_26, %c0_27] : memref<8x72xf32, #tpu.memory_space<vmem>>, vector<8x72xf32>
    %cst_28 = arith.constant dense<0.000000e+00> : vector<8x512xf32>
    %197 = tpu.matmul %196, %195, %cst_28 {dimension_numbers = #tpu.dot_dimension_numbers<[1], [0], [0], [1], [0, 0, 1, 1], [], []>} : vector<8x72xf32>, vector<72x512xf32>, vector<8x512xf32> -> vector<8x512xf32>
    %c0_29 = arith.constant 0 : index
    %c0_30 = arith.constant 0 : index
    %198 = vector.load %arg7[%c0_29, %c0_30] : memref<8x1xf32, #tpu.memory_space<vmem>>, vector<8x1xf32>
    %199 = vector.broadcast %198 : vector<8x1xf32> to vector<8x512xf32>
    %200 = arith.addf %197, %199 : vector<8x512xf32>
    %cst_31 = arith.constant 0.000000e+00 : f32
    %201 = vector.broadcast %cst_31 : f32 to vector<8x512xf32>
    %202 = arith.maximumf %200, %201 : vector<8x512xf32>
    %203 = vector.extract_strided_slice %202 {offsets = [0, 478], sizes = [8, 34], strides = [1, 1]} : vector<8x512xf32> to vector<8x34xf32>
    %204 = vector.extract_strided_slice %202 {offsets = [0, 0], sizes = [8, 478], strides = [1, 1]} : vector<8x512xf32> to vector<8x478xf32>
    %205 = tpu.concatenate %203, %204 in 1 : vector<8x34xf32>, vector<8x478xf32> -> vector<8x512xf32>
    %206 = vector.extract_strided_slice %2 {offsets = [0, 0], sizes = [1, 512], strides = [1, 1]} : vector<9x512xf32> to vector<1x512xf32>
    %207 = vector.broadcast %206 : vector<1x512xf32> to vector<8x512xf32>
    %208 = arith.mulf %205, %207 : vector<8x512xf32>
    %209 = vector.extract_strided_slice %202 {offsets = [0, 480], sizes = [8, 32], strides = [1, 1]} : vector<8x512xf32> to vector<8x32xf32>
    %210 = vector.extract_strided_slice %202 {offsets = [0, 0], sizes = [8, 480], strides = [1, 1]} : vector<8x512xf32> to vector<8x480xf32>
    %211 = tpu.concatenate %209, %210 in 1 : vector<8x32xf32>, vector<8x480xf32> -> vector<8x512xf32>
    %212 = vector.extract_strided_slice %2 {offsets = [1, 0], sizes = [1, 512], strides = [1, 1]} : vector<9x512xf32> to vector<1x512xf32>
    %213 = vector.broadcast %212 : vector<1x512xf32> to vector<8x512xf32>
    %214 = arith.mulf %211, %213 : vector<8x512xf32>
    %215 = vector.extract_strided_slice %202 {offsets = [0, 482], sizes = [8, 30], strides = [1, 1]} : vector<8x512xf32> to vector<8x30xf32>
    %216 = vector.extract_strided_slice %202 {offsets = [0, 0], sizes = [8, 482], strides = [1, 1]} : vector<8x512xf32> to vector<8x482xf32>
    %217 = tpu.concatenate %215, %216 in 1 : vector<8x30xf32>, vector<8x482xf32> -> vector<8x512xf32>
    %218 = vector.extract_strided_slice %2 {offsets = [2, 0], sizes = [1, 512], strides = [1, 1]} : vector<9x512xf32> to vector<1x512xf32>
    %219 = vector.broadcast %218 : vector<1x512xf32> to vector<8x512xf32>
    %220 = arith.mulf %217, %219 : vector<8x512xf32>
    %221 = vector.extract_strided_slice %202 {offsets = [0, 510], sizes = [8, 2], strides = [1, 1]} : vector<8x512xf32> to vector<8x2xf32>
    %222 = vector.extract_strided_slice %202 {offsets = [0, 0], sizes = [8, 510], strides = [1, 1]} : vector<8x512xf32> to vector<8x510xf32>
    %223 = tpu.concatenate %221, %222 in 1 : vector<8x2xf32>, vector<8x510xf32> -> vector<8x512xf32>
    %224 = vector.extract_strided_slice %2 {offsets = [3, 0], sizes = [1, 512], strides = [1, 1]} : vector<9x512xf32> to vector<1x512xf32>
    %225 = vector.broadcast %224 : vector<1x512xf32> to vector<8x512xf32>
    %226 = arith.mulf %223, %225 : vector<8x512xf32>
    %227 = vector.extract_strided_slice %202 {offsets = [0, 2], sizes = [8, 510], strides = [1, 1]} : vector<8x512xf32> to vector<8x510xf32>
    %228 = vector.extract_strided_slice %202 {offsets = [0, 0], sizes = [8, 2], strides = [1, 1]} : vector<8x512xf32> to vector<8x2xf32>
    %229 = tpu.concatenate %227, %228 in 1 : vector<8x510xf32>, vector<8x2xf32> -> vector<8x512xf32>
    %230 = vector.extract_strided_slice %2 {offsets = [5, 0], sizes = [1, 512], strides = [1, 1]} : vector<9x512xf32> to vector<1x512xf32>
    %231 = vector.broadcast %230 : vector<1x512xf32> to vector<8x512xf32>
    %232 = arith.mulf %229, %231 : vector<8x512xf32>
    %233 = vector.extract_strided_slice %202 {offsets = [0, 30], sizes = [8, 482], strides = [1, 1]} : vector<8x512xf32> to vector<8x482xf32>
    %234 = vector.extract_strided_slice %202 {offsets = [0, 0], sizes = [8, 30], strides = [1, 1]} : vector<8x512xf32> to vector<8x30xf32>
    %235 = tpu.concatenate %233, %234 in 1 : vector<8x482xf32>, vector<8x30xf32> -> vector<8x512xf32>
    %236 = vector.extract_strided_slice %2 {offsets = [6, 0], sizes = [1, 512], strides = [1, 1]} : vector<9x512xf32> to vector<1x512xf32>
    %237 = vector.broadcast %236 : vector<1x512xf32> to vector<8x512xf32>
    %238 = arith.mulf %235, %237 : vector<8x512xf32>
    %239 = vector.extract_strided_slice %202 {offsets = [0, 32], sizes = [8, 480], strides = [1, 1]} : vector<8x512xf32> to vector<8x480xf32>
    %240 = vector.extract_strided_slice %202 {offsets = [0, 0], sizes = [8, 32], strides = [1, 1]} : vector<8x512xf32> to vector<8x32xf32>
    %241 = tpu.concatenate %239, %240 in 1 : vector<8x480xf32>, vector<8x32xf32> -> vector<8x512xf32>
    %242 = vector.extract_strided_slice %2 {offsets = [7, 0], sizes = [1, 512], strides = [1, 1]} : vector<9x512xf32> to vector<1x512xf32>
    %243 = vector.broadcast %242 : vector<1x512xf32> to vector<8x512xf32>
    %244 = arith.mulf %241, %243 : vector<8x512xf32>
    %245 = vector.extract_strided_slice %202 {offsets = [0, 34], sizes = [8, 478], strides = [1, 1]} : vector<8x512xf32> to vector<8x478xf32>
    %246 = vector.extract_strided_slice %202 {offsets = [0, 0], sizes = [8, 34], strides = [1, 1]} : vector<8x512xf32> to vector<8x34xf32>
    %247 = tpu.concatenate %245, %246 in 1 : vector<8x478xf32>, vector<8x34xf32> -> vector<8x512xf32>
    %248 = vector.extract_strided_slice %2 {offsets = [8, 0], sizes = [1, 512], strides = [1, 1]} : vector<9x512xf32> to vector<1x512xf32>
    %249 = vector.broadcast %248 : vector<1x512xf32> to vector<8x512xf32>
    %250 = arith.mulf %247, %249 : vector<8x512xf32>
    %251 = tpu.concatenate %208, %214, %220, %226, %202, %232, %238, %244, %250 in 0 : vector<8x512xf32>, vector<8x512xf32>, vector<8x512xf32>, vector<8x512xf32>, vector<8x512xf32>, vector<8x512xf32>, vector<8x512xf32>, vector<8x512xf32>, vector<8x512xf32> -> vector<72x512xf32>
    %c0_32 = arith.constant 0 : index
    %c0_33 = arith.constant 0 : index
    %252 = vector.load %arg8[%c0_32, %c0_33] : memref<8x72xf32, #tpu.memory_space<vmem>>, vector<8x72xf32>
    %cst_34 = arith.constant dense<0.000000e+00> : vector<8x512xf32>
    %253 = tpu.matmul %252, %251, %cst_34 {dimension_numbers = #tpu.dot_dimension_numbers<[1], [0], [0], [1], [0, 0, 1, 1], [], []>} : vector<8x72xf32>, vector<72x512xf32>, vector<8x512xf32> -> vector<8x512xf32>
    %c0_35 = arith.constant 0 : index
    %c0_36 = arith.constant 0 : index
    %254 = vector.load %arg9[%c0_35, %c0_36] : memref<8x1xf32, #tpu.memory_space<vmem>>, vector<8x1xf32>
    %255 = vector.broadcast %254 : vector<8x1xf32> to vector<8x512xf32>
    %256 = arith.addf %253, %255 : vector<8x512xf32>
    %c0_37 = arith.constant 0 : index
    %257 = memref.load %arg14[%c0_37] : memref<2xf32, #tpu.memory_space<smem>>
    %258 = vector.broadcast %257 : f32 to vector<8x512xf32>
    %259 = arith.mulf %256, %258 : vector<8x512xf32>
    %260 = arith.addf %144, %259 : vector<8x512xf32>
    %cst_38 = arith.constant 0.000000e+00 : f32
    %261 = vector.broadcast %cst_38 : f32 to vector<8x512xf32>
    %262 = arith.maximumf %260, %261 : vector<8x512xf32>
    %263 = vector.extract_strided_slice %262 {offsets = [0, 478], sizes = [8, 34], strides = [1, 1]} : vector<8x512xf32> to vector<8x34xf32>
    %264 = vector.extract_strided_slice %262 {offsets = [0, 0], sizes = [8, 478], strides = [1, 1]} : vector<8x512xf32> to vector<8x478xf32>
    %265 = tpu.concatenate %263, %264 in 1 : vector<8x34xf32>, vector<8x478xf32> -> vector<8x512xf32>
    %266 = vector.extract_strided_slice %2 {offsets = [0, 0], sizes = [1, 512], strides = [1, 1]} : vector<9x512xf32> to vector<1x512xf32>
    %267 = vector.broadcast %266 : vector<1x512xf32> to vector<8x512xf32>
    %268 = arith.mulf %265, %267 : vector<8x512xf32>
    %269 = vector.extract_strided_slice %262 {offsets = [0, 480], sizes = [8, 32], strides = [1, 1]} : vector<8x512xf32> to vector<8x32xf32>
    %270 = vector.extract_strided_slice %262 {offsets = [0, 0], sizes = [8, 480], strides = [1, 1]} : vector<8x512xf32> to vector<8x480xf32>
    %271 = tpu.concatenate %269, %270 in 1 : vector<8x32xf32>, vector<8x480xf32> -> vector<8x512xf32>
    %272 = vector.extract_strided_slice %2 {offsets = [1, 0], sizes = [1, 512], strides = [1, 1]} : vector<9x512xf32> to vector<1x512xf32>
    %273 = vector.broadcast %272 : vector<1x512xf32> to vector<8x512xf32>
    %274 = arith.mulf %271, %273 : vector<8x512xf32>
    %275 = vector.extract_strided_slice %262 {offsets = [0, 482], sizes = [8, 30], strides = [1, 1]} : vector<8x512xf32> to vector<8x30xf32>
    %276 = vector.extract_strided_slice %262 {offsets = [0, 0], sizes = [8, 482], strides = [1, 1]} : vector<8x512xf32> to vector<8x482xf32>
    %277 = tpu.concatenate %275, %276 in 1 : vector<8x30xf32>, vector<8x482xf32> -> vector<8x512xf32>
    %278 = vector.extract_strided_slice %2 {offsets = [2, 0], sizes = [1, 512], strides = [1, 1]} : vector<9x512xf32> to vector<1x512xf32>
    %279 = vector.broadcast %278 : vector<1x512xf32> to vector<8x512xf32>
    %280 = arith.mulf %277, %279 : vector<8x512xf32>
    %281 = vector.extract_strided_slice %262 {offsets = [0, 510], sizes = [8, 2], strides = [1, 1]} : vector<8x512xf32> to vector<8x2xf32>
    %282 = vector.extract_strided_slice %262 {offsets = [0, 0], sizes = [8, 510], strides = [1, 1]} : vector<8x512xf32> to vector<8x510xf32>
    %283 = tpu.concatenate %281, %282 in 1 : vector<8x2xf32>, vector<8x510xf32> -> vector<8x512xf32>
    %284 = vector.extract_strided_slice %2 {offsets = [3, 0], sizes = [1, 512], strides = [1, 1]} : vector<9x512xf32> to vector<1x512xf32>
    %285 = vector.broadcast %284 : vector<1x512xf32> to vector<8x512xf32>
    %286 = arith.mulf %283, %285 : vector<8x512xf32>
    %287 = vector.extract_strided_slice %262 {offsets = [0, 2], sizes = [8, 510], strides = [1, 1]} : vector<8x512xf32> to vector<8x510xf32>
    %288 = vector.extract_strided_slice %262 {offsets = [0, 0], sizes = [8, 2], strides = [1, 1]} : vector<8x512xf32> to vector<8x2xf32>
    %289 = tpu.concatenate %287, %288 in 1 : vector<8x510xf32>, vector<8x2xf32> -> vector<8x512xf32>
    %290 = vector.extract_strided_slice %2 {offsets = [5, 0], sizes = [1, 512], strides = [1, 1]} : vector<9x512xf32> to vector<1x512xf32>
    %291 = vector.broadcast %290 : vector<1x512xf32> to vector<8x512xf32>
    %292 = arith.mulf %289, %291 : vector<8x512xf32>
    %293 = vector.extract_strided_slice %262 {offsets = [0, 30], sizes = [8, 482], strides = [1, 1]} : vector<8x512xf32> to vector<8x482xf32>
    %294 = vector.extract_strided_slice %262 {offsets = [0, 0], sizes = [8, 30], strides = [1, 1]} : vector<8x512xf32> to vector<8x30xf32>
    %295 = tpu.concatenate %293, %294 in 1 : vector<8x482xf32>, vector<8x30xf32> -> vector<8x512xf32>
    %296 = vector.extract_strided_slice %2 {offsets = [6, 0], sizes = [1, 512], strides = [1, 1]} : vector<9x512xf32> to vector<1x512xf32>
    %297 = vector.broadcast %296 : vector<1x512xf32> to vector<8x512xf32>
    %298 = arith.mulf %295, %297 : vector<8x512xf32>
    %299 = vector.extract_strided_slice %262 {offsets = [0, 32], sizes = [8, 480], strides = [1, 1]} : vector<8x512xf32> to vector<8x480xf32>
    %300 = vector.extract_strided_slice %262 {offsets = [0, 0], sizes = [8, 32], strides = [1, 1]} : vector<8x512xf32> to vector<8x32xf32>
    %301 = tpu.concatenate %299, %300 in 1 : vector<8x480xf32>, vector<8x32xf32> -> vector<8x512xf32>
    %302 = vector.extract_strided_slice %2 {offsets = [7, 0], sizes = [1, 512], strides = [1, 1]} : vector<9x512xf32> to vector<1x512xf32>
    %303 = vector.broadcast %302 : vector<1x512xf32> to vector<8x512xf32>
    %304 = arith.mulf %301, %303 : vector<8x512xf32>
    %305 = vector.extract_strided_slice %262 {offsets = [0, 34], sizes = [8, 478], strides = [1, 1]} : vector<8x512xf32> to vector<8x478xf32>
    %306 = vector.extract_strided_slice %262 {offsets = [0, 0], sizes = [8, 34], strides = [1, 1]} : vector<8x512xf32> to vector<8x34xf32>
    %307 = tpu.concatenate %305, %306 in 1 : vector<8x478xf32>, vector<8x34xf32> -> vector<8x512xf32>
    %308 = vector.extract_strided_slice %2 {offsets = [8, 0], sizes = [1, 512], strides = [1, 1]} : vector<9x512xf32> to vector<1x512xf32>
    %309 = vector.broadcast %308 : vector<1x512xf32> to vector<8x512xf32>
    %310 = arith.mulf %307, %309 : vector<8x512xf32>
    %311 = tpu.concatenate %268, %274, %280, %286, %262, %292, %298, %304, %310 in 0 : vector<8x512xf32>, vector<8x512xf32>, vector<8x512xf32>, vector<8x512xf32>, vector<8x512xf32>, vector<8x512xf32>, vector<8x512xf32>, vector<8x512xf32>, vector<8x512xf32> -> vector<72x512xf32>
    %c0_39 = arith.constant 0 : index
    %c0_40 = arith.constant 0 : index
    %312 = vector.load %arg10[%c0_39, %c0_40] : memref<8x72xf32, #tpu.memory_space<vmem>>, vector<8x72xf32>
    %cst_41 = arith.constant dense<0.000000e+00> : vector<8x512xf32>
    %313 = tpu.matmul %312, %311, %cst_41 {dimension_numbers = #tpu.dot_dimension_numbers<[1], [0], [0], [1], [0, 0, 1, 1], [], []>} : vector<8x72xf32>, vector<72x512xf32>, vector<8x512xf32> -> vector<8x512xf32>
    %c0_42 = arith.constant 0 : index
    %c0_43 = arith.constant 0 : index
    %314 = vector.load %arg11[%c0_42, %c0_43] : memref<8x1xf32, #tpu.memory_space<vmem>>, vector<8x1xf32>
    %315 = vector.broadcast %314 : vector<8x1xf32> to vector<8x512xf32>
    %316 = arith.addf %313, %315 : vector<8x512xf32>
    %cst_44 = arith.constant 0.000000e+00 : f32
    %317 = vector.broadcast %cst_44 : f32 to vector<8x512xf32>
    %318 = arith.maximumf %316, %317 : vector<8x512xf32>
    %319 = vector.extract_strided_slice %318 {offsets = [0, 478], sizes = [8, 34], strides = [1, 1]} : vector<8x512xf32> to vector<8x34xf32>
    %320 = vector.extract_strided_slice %318 {offsets = [0, 0], sizes = [8, 478], strides = [1, 1]} : vector<8x512xf32> to vector<8x478xf32>
    %321 = tpu.concatenate %319, %320 in 1 : vector<8x34xf32>, vector<8x478xf32> -> vector<8x512xf32>
    %322 = vector.extract_strided_slice %2 {offsets = [0, 0], sizes = [1, 512], strides = [1, 1]} : vector<9x512xf32> to vector<1x512xf32>
    %323 = vector.broadcast %322 : vector<1x512xf32> to vector<8x512xf32>
    %324 = arith.mulf %321, %323 : vector<8x512xf32>
    %325 = vector.extract_strided_slice %318 {offsets = [0, 480], sizes = [8, 32], strides = [1, 1]} : vector<8x512xf32> to vector<8x32xf32>
    %326 = vector.extract_strided_slice %318 {offsets = [0, 0], sizes = [8, 480], strides = [1, 1]} : vector<8x512xf32> to vector<8x480xf32>
    %327 = tpu.concatenate %325, %326 in 1 : vector<8x32xf32>, vector<8x480xf32> -> vector<8x512xf32>
    %328 = vector.extract_strided_slice %2 {offsets = [1, 0], sizes = [1, 512], strides = [1, 1]} : vector<9x512xf32> to vector<1x512xf32>
    %329 = vector.broadcast %328 : vector<1x512xf32> to vector<8x512xf32>
    %330 = arith.mulf %327, %329 : vector<8x512xf32>
    %331 = vector.extract_strided_slice %318 {offsets = [0, 482], sizes = [8, 30], strides = [1, 1]} : vector<8x512xf32> to vector<8x30xf32>
    %332 = vector.extract_strided_slice %318 {offsets = [0, 0], sizes = [8, 482], strides = [1, 1]} : vector<8x512xf32> to vector<8x482xf32>
    %333 = tpu.concatenate %331, %332 in 1 : vector<8x30xf32>, vector<8x482xf32> -> vector<8x512xf32>
    %334 = vector.extract_strided_slice %2 {offsets = [2, 0], sizes = [1, 512], strides = [1, 1]} : vector<9x512xf32> to vector<1x512xf32>
    %335 = vector.broadcast %334 : vector<1x512xf32> to vector<8x512xf32>
    %336 = arith.mulf %333, %335 : vector<8x512xf32>
    %337 = vector.extract_strided_slice %318 {offsets = [0, 510], sizes = [8, 2], strides = [1, 1]} : vector<8x512xf32> to vector<8x2xf32>
    %338 = vector.extract_strided_slice %318 {offsets = [0, 0], sizes = [8, 510], strides = [1, 1]} : vector<8x512xf32> to vector<8x510xf32>
    %339 = tpu.concatenate %337, %338 in 1 : vector<8x2xf32>, vector<8x510xf32> -> vector<8x512xf32>
    %340 = vector.extract_strided_slice %2 {offsets = [3, 0], sizes = [1, 512], strides = [1, 1]} : vector<9x512xf32> to vector<1x512xf32>
    %341 = vector.broadcast %340 : vector<1x512xf32> to vector<8x512xf32>
    %342 = arith.mulf %339, %341 : vector<8x512xf32>
    %343 = vector.extract_strided_slice %318 {offsets = [0, 2], sizes = [8, 510], strides = [1, 1]} : vector<8x512xf32> to vector<8x510xf32>
    %344 = vector.extract_strided_slice %318 {offsets = [0, 0], sizes = [8, 2], strides = [1, 1]} : vector<8x512xf32> to vector<8x2xf32>
    %345 = tpu.concatenate %343, %344 in 1 : vector<8x510xf32>, vector<8x2xf32> -> vector<8x512xf32>
    %346 = vector.extract_strided_slice %2 {offsets = [5, 0], sizes = [1, 512], strides = [1, 1]} : vector<9x512xf32> to vector<1x512xf32>
    %347 = vector.broadcast %346 : vector<1x512xf32> to vector<8x512xf32>
    %348 = arith.mulf %345, %347 : vector<8x512xf32>
    %349 = vector.extract_strided_slice %318 {offsets = [0, 30], sizes = [8, 482], strides = [1, 1]} : vector<8x512xf32> to vector<8x482xf32>
    %350 = vector.extract_strided_slice %318 {offsets = [0, 0], sizes = [8, 30], strides = [1, 1]} : vector<8x512xf32> to vector<8x30xf32>
    %351 = tpu.concatenate %349, %350 in 1 : vector<8x482xf32>, vector<8x30xf32> -> vector<8x512xf32>
    %352 = vector.extract_strided_slice %2 {offsets = [6, 0], sizes = [1, 512], strides = [1, 1]} : vector<9x512xf32> to vector<1x512xf32>
    %353 = vector.broadcast %352 : vector<1x512xf32> to vector<8x512xf32>
    %354 = arith.mulf %351, %353 : vector<8x512xf32>
    %355 = vector.extract_strided_slice %318 {offsets = [0, 32], sizes = [8, 480], strides = [1, 1]} : vector<8x512xf32> to vector<8x480xf32>
    %356 = vector.extract_strided_slice %318 {offsets = [0, 0], sizes = [8, 32], strides = [1, 1]} : vector<8x512xf32> to vector<8x32xf32>
    %357 = tpu.concatenate %355, %356 in 1 : vector<8x480xf32>, vector<8x32xf32> -> vector<8x512xf32>
    %358 = vector.extract_strided_slice %2 {offsets = [7, 0], sizes = [1, 512], strides = [1, 1]} : vector<9x512xf32> to vector<1x512xf32>
    %359 = vector.broadcast %358 : vector<1x512xf32> to vector<8x512xf32>
    %360 = arith.mulf %357, %359 : vector<8x512xf32>
    %361 = vector.extract_strided_slice %318 {offsets = [0, 34], sizes = [8, 478], strides = [1, 1]} : vector<8x512xf32> to vector<8x478xf32>
    %362 = vector.extract_strided_slice %318 {offsets = [0, 0], sizes = [8, 34], strides = [1, 1]} : vector<8x512xf32> to vector<8x34xf32>
    %363 = tpu.concatenate %361, %362 in 1 : vector<8x478xf32>, vector<8x34xf32> -> vector<8x512xf32>
    %364 = vector.extract_strided_slice %2 {offsets = [8, 0], sizes = [1, 512], strides = [1, 1]} : vector<9x512xf32> to vector<1x512xf32>
    %365 = vector.broadcast %364 : vector<1x512xf32> to vector<8x512xf32>
    %366 = arith.mulf %363, %365 : vector<8x512xf32>
    %367 = tpu.concatenate %324, %330, %336, %342, %318, %348, %354, %360, %366 in 0 : vector<8x512xf32>, vector<8x512xf32>, vector<8x512xf32>, vector<8x512xf32>, vector<8x512xf32>, vector<8x512xf32>, vector<8x512xf32>, vector<8x512xf32>, vector<8x512xf32> -> vector<72x512xf32>
    %c0_45 = arith.constant 0 : index
    %c0_46 = arith.constant 0 : index
    %368 = vector.load %arg12[%c0_45, %c0_46] : memref<8x72xf32, #tpu.memory_space<vmem>>, vector<8x72xf32>
    %cst_47 = arith.constant dense<0.000000e+00> : vector<8x512xf32>
    %369 = tpu.matmul %368, %367, %cst_47 {dimension_numbers = #tpu.dot_dimension_numbers<[1], [0], [0], [1], [0, 0, 1, 1], [], []>} : vector<8x72xf32>, vector<72x512xf32>, vector<8x512xf32> -> vector<8x512xf32>
    %c0_48 = arith.constant 0 : index
    %c0_49 = arith.constant 0 : index
    %370 = vector.load %arg13[%c0_48, %c0_49] : memref<8x1xf32, #tpu.memory_space<vmem>>, vector<8x1xf32>
    %371 = vector.broadcast %370 : vector<8x1xf32> to vector<8x512xf32>
    %372 = arith.addf %369, %371 : vector<8x512xf32>
    %c1 = arith.constant 1 : index
    %373 = memref.load %arg14[%c1] : memref<2xf32, #tpu.memory_space<smem>>
    %374 = vector.broadcast %373 : f32 to vector<8x512xf32>
    %375 = arith.mulf %372, %374 : vector<8x512xf32>
    %376 = arith.addf %260, %375 : vector<8x512xf32>
    %c0_50 = arith.constant 0 : index
    %c0_51 = arith.constant 0 : index
    %377 = vector.load %arg15[%c0_50, %c0_51] : memref<8x512xf32, #tpu.memory_space<vmem>>, vector<8x512xf32>
    tpu.vector_store %arg15[%c0_50, %c0_51], %376 {strides = array<i32>} : memref<8x512xf32, #tpu.memory_space<vmem>>, vector<8x512xf32>,
    return
  }
  func.func @transform_0(%arg0: i32) -> (i32, i32) {
    %c0_i32 = arith.constant 0 : i32
    %c0_i32_0 = arith.constant 0 : i32
    return %c0_i32, %arg0 : i32, i32
  }
  func.func @transform_1(%arg0: i32) -> (i32, i32) {
    %c0_i32 = arith.constant 0 : i32
    %c0_i32_0 = arith.constant 0 : i32
    %c0_i32_1 = arith.constant 0 : i32
    return %c0_i32, %c0_i32_0 : i32, i32
  }
  func.func @transform_2(%arg0: i32) -> (i32, i32) {
    %c0_i32 = arith.constant 0 : i32
    %c0_i32_0 = arith.constant 0 : i32
    %c0_i32_1 = arith.constant 0 : i32
    return %c0_i32, %c0_i32_0 : i32, i32
  }
  func.func @transform_3(%arg0: i32) -> (i32, i32) {
    %c0_i32 = arith.constant 0 : i32
    %c0_i32_0 = arith.constant 0 : i32
    %c0_i32_1 = arith.constant 0 : i32
    return %c0_i32, %c0_i32_0 : i32, i32
  }
  func.func @transform_4(%arg0: i32) -> (i32, i32) {
    %c0_i32 = arith.constant 0 : i32
    %c0_i32_0 = arith.constant 0 : i32
    %c0_i32_1 = arith.constant 0 : i32
    return %c0_i32, %c0_i32_0 : i32, i32
  }
  func.func @transform_5(%arg0: i32) -> (i32, i32) {
    %c0_i32 = arith.constant 0 : i32
    %c0_i32_0 = arith.constant 0 : i32
    %c0_i32_1 = arith.constant 0 : i32
    return %c0_i32, %c0_i32_0 : i32, i32
  }
  func.func @transform_6(%arg0: i32) -> (i32, i32) {
    %c0_i32 = arith.constant 0 : i32
    %c0_i32_0 = arith.constant 0 : i32
    %c0_i32_1 = arith.constant 0 : i32
    return %c0_i32, %c0_i32_0 : i32, i32
  }
  func.func @transform_7(%arg0: i32) -> (i32, i32) {
    %c0_i32 = arith.constant 0 : i32
    %c0_i32_0 = arith.constant 0 : i32
    %c0_i32_1 = arith.constant 0 : i32
    return %c0_i32, %c0_i32_0 : i32, i32
  }
  func.func @transform_8(%arg0: i32) -> (i32, i32) {
    %c0_i32 = arith.constant 0 : i32
    %c0_i32_0 = arith.constant 0 : i32
    %c0_i32_1 = arith.constant 0 : i32
    return %c0_i32, %c0_i32_0 : i32, i32
  }
  func.func @transform_9(%arg0: i32) -> (i32, i32) {
    %c0_i32 = arith.constant 0 : i32
    %c0_i32_0 = arith.constant 0 : i32
    %c0_i32_1 = arith.constant 0 : i32
    return %c0_i32, %c0_i32_0 : i32, i32
  }
  func.func @transform_10(%arg0: i32) -> (i32, i32) {
    %c0_i32 = arith.constant 0 : i32
    %c0_i32_0 = arith.constant 0 : i32
    %c0_i32_1 = arith.constant 0 : i32
    return %c0_i32, %c0_i32_0 : i32, i32
  }
  func.func @transform_11(%arg0: i32) -> (i32, i32) {
    %c0_i32 = arith.constant 0 : i32
    %c0_i32_0 = arith.constant 0 : i32
    %c0_i32_1 = arith.constant 0 : i32
    return %c0_i32, %c0_i32_0 : i32, i32
  }
  func.func @transform_12(%arg0: i32) -> (i32, i32) {
    %c0_i32 = arith.constant 0 : i32
    %c0_i32_0 = arith.constant 0 : i32
    %c0_i32_1 = arith.constant 0 : i32
    return %c0_i32, %c0_i32_0 : i32, i32
  }
  func.func @transform_13(%arg0: i32) -> i32 {
    %c0_i32 = arith.constant 0 : i32
    %c0_i32_0 = arith.constant 0 : i32
    return %c0_i32 : i32
  }
  func.func @transform_14(%arg0: i32) -> (i32, i32) {
    %c0_i32 = arith.constant 0 : i32
    %c0_i32_0 = arith.constant 0 : i32
    return %c0_i32, %arg0 : i32, i32
  }
}

</mosaic_0001>

<llo_original>
// kernel: tpu_custom_call.1
$region0: #{tpu_custom_call.1}
  #allocation0 [shape = 'u32[]', space=smem, size = 0x4, offset = 0x4, fixed_abs, tag = 'smem constant byte address 0x4 - core index']
  #allocation1 [shape = 'u32[72,128]{1,0:T(1,128)}', space=vmem, size = 0x9000, scoped, tag = 'internal scratch']
  %s0 = inlined_call_operand.hbm [shape: f32[8,512], index: 0, kind: input, shape index: {}]
  %s1 = inlined_call_operand.hbm [shape: f32[9,512], index: 1, kind: input, shape index: {}]
  %s2 = inlined_call_operand.hbm [shape: f32[9,512], index: 2, kind: input, shape index: {}]
  %s3 = inlined_call_operand.vmem [shape: f32[8,72], index: 3, kind: input, shape index: {}]
  %s4 = inlined_call_operand.vmem [shape: f32[8,1], index: 4, kind: input, shape index: {}]
  %s5 = inlined_call_operand.vmem [shape: f32[8,72], index: 5, kind: input, shape index: {}]
  %s6 = inlined_call_operand.vmem [shape: f32[8,1], index: 6, kind: input, shape index: {}]
  %s7 = inlined_call_operand.vmem [shape: f32[8,72], index: 7, kind: input, shape index: {}]
  %s8 = inlined_call_operand.vmem [shape: f32[8,1], index: 8, kind: input, shape index: {}]
  %s9 = inlined_call_operand.vmem [shape: f32[8,72], index: 9, kind: input, shape index: {}]
  %s10 = inlined_call_operand.vmem [shape: f32[8,1], index: 10, kind: input, shape index: {}]
  %s11 = inlined_call_operand.vmem [shape: f32[8,72], index: 11, kind: input, shape index: {}]
  %s12 = inlined_call_operand.vmem [shape: f32[8,1], index: 12, kind: input, shape index: {}]
  %s13 = inlined_call_operand.vmem [shape: f32[2], index: 13, kind: input, shape index: {}]
  %s14 = inlined_call_operand.hbm [shape: f32[8,512], index: 14, kind: output, shape index: {}]
  %s15 = sld [smem:[#allocation0]]
  $region82: #{tpu_custom_call.1} parent=0
    _
  %s17 = ssub.s32 1, %s15
  %s18 = scalar_select 0, %s17, %s15
  $region1: #{tpu_custom_call.1} parent=0
    #allocation2 [shape = 'u8[16384]{0}', space=vmem, size = 0x4000, scoped, tag = 'input window, operand 0, single buffered']
    #allocation3 [shape = 's32[1]{0}', space=sflag, size = 0x4, scoped, tag = 'scoped memory for tpu_custom_call.1']
    #allocation4 [shape = 's32[1]{0}', space=sflag, size = 0x4, scoped, tag = 'scoped memory for tpu_custom_call.1']
    #allocation5 [shape = 's32[1]{0}', space=sflag, size = 0x4, scoped, tag = 'scoped memory for tpu_custom_call.1']
    #allocation6 [shape = 'u8[32768]{0}', space=vmem, size = 0x8000, scoped, tag = 'input window, operand 1, single buffered']
    #allocation7 [shape = 's32[1]{0}', space=sflag, size = 0x4, scoped, tag = 'scoped memory for tpu_custom_call.1']
    #allocation8 [shape = 'u8[32768]{0}', space=vmem, size = 0x8000, scoped, tag = 'input window, operand 2, single buffered']
    #allocation9 [shape = 'u8[512]{0}', space=smem, size = 0x200, scoped, tag = 'input window, operand 13, single buffered']
    #allocation10 [shape = 'u8[16384]{0}', space=vmem, size = 0x4000, scoped, tag = 'output window, operand 0, single buffered']
    %19 = vsyncpa [#allocation3], 0
    %20 = vsyncpa [#allocation7], 0
    %21 = vsyncpa [#allocation5], 0
    %22 = vsyncpa [#allocation4], 0
    // Predicated region
    $region2: #{tpu_custom_call.1} parent=1 // pred_check
      _
    $region3: #{tpu_custom_call.1} parent=1 // pred_check_branch
      %24 = sbr.rel (0) target = $region5
    $region4: #{tpu_custom_call.1} parent=1 // pred_region
      %26 = vsyncadd [#allocation3], 0
      %s28 = sshll.u32 %s0, 4
      %s29 = int_to_ptr.hbm [resolvable:$true] %s28
      %s30 = sshll.u32 [#allocation2], 4
      %s31 = int_to_ptr.vmem [resolvable:$true] %s30
      %33 = dma.hbm_to_vmem [thread:$0]  %s29, 512, %s31, [#allocation3]
    $region5: #{tpu_custom_call.1} parent=1 // pred_fallthru
      _
    // Predicated region
    $region6: #{tpu_custom_call.1} parent=1 // pred_check
      _
    $region7: #{tpu_custom_call.1} parent=1 // pred_check_branch
      %35 = sbr.rel (0) target = $region9
    $region8: #{tpu_custom_call.1} parent=1 // pred_region
      %37 = vsyncadd [#allocation7], 0
      %s38 = sshll.u32 %s1, 4
      %s39 = int_to_ptr.hbm [resolvable:$true] %s38
      %s40 = sshll.u32 [#allocation6], 4
      %s41 = int_to_ptr.vmem [resolvable:$true] %s40
      %46 = dma.hbm_to_vmem [thread:$0]  %s39, 1024, %s41, [#allocation7], 512, 512, 32
    $region9: #{tpu_custom_call.1} parent=1 // pred_fallthru
      _
    // Predicated region
    $region10: #{tpu_custom_call.1} parent=1 // pred_check
      _
    $region11: #{tpu_custom_call.1} parent=1 // pred_check_branch
      %48 = sbr.rel (0) target = $region13
    $region12: #{tpu_custom_call.1} parent=1 // pred_region
      %50 = vsyncadd [#allocation7], 0
      %s51 = sshll.u32 %s2, 4
      %s52 = int_to_ptr.hbm [resolvable:$true] %s51
      %s53 = sshll.u32 [#allocation8], 4
      %s54 = int_to_ptr.vmem [resolvable:$true] %s53
      %59 = dma.hbm_to_vmem [thread:$0]  %s52, 1024, %s54, [#allocation7], 512, 512, 32
    $region13: #{tpu_custom_call.1} parent=1 // pred_fallthru
      _
    // Predicated region
    $region14: #{tpu_custom_call.1} parent=1 // pred_check
      _
    $region15: #{tpu_custom_call.1} parent=1 // pred_check_branch
      %61 = sbr.rel (0) target = $region17
    $region16: #{tpu_custom_call.1} parent=1 // pred_region
      _
    $region17: #{tpu_custom_call.1} parent=1 // pred_fallthru
      _
    // Predicated region
    $region18: #{tpu_custom_call.1} parent=1 // pred_check
      _
    $region19: #{tpu_custom_call.1} parent=1 // pred_check_branch
      %63 = sbr.rel (0) target = $region21
    $region20: #{tpu_custom_call.1} parent=1 // pred_region
      _
    $region21: #{tpu_custom_call.1} parent=1 // pred_fallthru
      _
    // Predicated region
    $region22: #{tpu_custom_call.1} parent=1 // pred_check
      _
    $region23: #{tpu_custom_call.1} parent=1 // pred_check_branch
      %65 = sbr.rel (0) target = $region25
    $region24: #{tpu_custom_call.1} parent=1 // pred_region
      _
    $region25: #{tpu_custom_call.1} parent=1 // pred_fallthru
      _
    // Predicated region
    $region26: #{tpu_custom_call.1} parent=1 // pred_check
      _
    $region27: #{tpu_custom_call.1} parent=1 // pred_check_branch
      %67 = sbr.rel (0) target = $region29
    $region28: #{tpu_custom_call.1} parent=1 // pred_region
      _
    $region29: #{tpu_custom_call.1} parent=1 // pred_fallthru
      _
    // Predicated region
    $region30: #{tpu_custom_call.1} parent=1 // pred_check
      _
    $region31: #{tpu_custom_call.1} parent=1 // pred_check_branch
      %69 = sbr.rel (0) target = $region33
    $region32: #{tpu_custom_call.1} parent=1 // pred_region
      _
    $region33: #{tpu_custom_call.1} parent=1 // pred_fallthru
      _
    // Predicated region
    $region34: #{tpu_custom_call.1} parent=1 // pred_check
      _
    $region35: #{tpu_custom_call.1} parent=1 // pred_check_branch
      %71 = sbr.rel (0) target = $region37
    $region36: #{tpu_custom_call.1} parent=1 // pred_region
      _
    $region37: #{tpu_custom_call.1} parent=1 // pred_fallthru
      _
    // Predicated region
    $region38: #{tpu_custom_call.1} parent=1 // pred_check
      _
    $region39: #{tpu_custom_call.1} parent=1 // pred_check_branch
      %73 = sbr.rel (0) target = $region41
    $region40: #{tpu_custom_call.1} parent=1 // pred_region
      _
    $region41: #{tpu_custom_call.1} parent=1 // pred_fallthru
      _
    // Predicated region
    $region42: #{tpu_custom_call.1} parent=1 // pred_check
      _
    $region43: #{tpu_custom_call.1} parent=1 // pred_check_branch
      %75 = sbr.rel (0) target = $region45
    $region44: #{tpu_custom_call.1} parent=1 // pred_region
      _
    $region45: #{tpu_custom_call.1} parent=1 // pred_fallthru
      _
    // Predicated region
    $region46: #{tpu_custom_call.1} parent=1 // pred_check
      _
    $region47: #{tpu_custom_call.1} parent=1 // pred_check_branch
      %77 = sbr.rel (0) target = $region49
    $region48: #{tpu_custom_call.1} parent=1 // pred_region
      _
    $region49: #{tpu_custom_call.1} parent=1 // pred_fallthru
      _
    // Predicated region
    $region50: #{tpu_custom_call.1} parent=1 // pred_check
      _
    $region51: #{tpu_custom_call.1} parent=1 // pred_check_branch
      %79 = sbr.rel (0) target = $region53
    $region52: #{tpu_custom_call.1} parent=1 // pred_region
      _
    $region53: #{tpu_custom_call.1} parent=1 // pred_fallthru
      _
    // Predicated region
    $region54: #{tpu_custom_call.1} parent=1 // pred_check
      _
    $region55: #{tpu_custom_call.1} parent=1 // pred_check_branch
      %81 = sbr.rel (0) target = $region57
    $region56: #{tpu_custom_call.1} parent=1 // pred_region
      %83 = vsyncadd [#allocation5], 0
      %s85 = sshll.u32 %s13, 4
      %s86 = int_to_ptr.vmem [resolvable:$true] %s85
      %88 = dma.vmem_to_smem %s86, 16, [#allocation9], [#allocation5]
    $region57: #{tpu_custom_call.1} parent=1 // pred_fallthru
      _
    // Predicated region
    $region58: #{tpu_custom_call.1} parent=1 // pred_check
      _
    $region59: #{tpu_custom_call.1} parent=1 // pred_check_branch
      %90 = sbr.rel (0) target = $region61
    $region60: #{tpu_custom_call.1} parent=1 // pred_region
      %92 = dma.done [#allocation3], 512
    $region61: #{tpu_custom_call.1} parent=1 // pred_fallthru
      _
    // Predicated region
    $region62: #{tpu_custom_call.1} parent=1 // pred_check
      _
    $region63: #{tpu_custom_call.1} parent=1 // pred_check_branch
      %94 = sbr.rel (0) target = $region65
    $region64: #{tpu_custom_call.1} parent=1 // pred_region
      %96 = dma.done [#allocation7], 1024
    $region65: #{tpu_custom_call.1} parent=1 // pred_fallthru
      _
    // Predicated region
    $region66: #{tpu_custom_call.1} parent=1 // pred_check
      _
    $region67: #{tpu_custom_call.1} parent=1 // pred_check_branch
      %98 = sbr.rel (0) target = $region69
    $region68: #{tpu_custom_call.1} parent=1 // pred_region
      %100 = dma.done [#allocation7], 1024
    $region69: #{tpu_custom_call.1} parent=1 // pred_fallthru
      _
    // Predicated region
    $region70: #{tpu_custom_call.1} parent=1 // pred_check
      _
    $region71: #{tpu_custom_call.1} parent=1 // pred_check_branch
      %102 = sbr.rel (0) target = $region73
    $region72: #{tpu_custom_call.1} parent=1 // pred_region
      %104 = dma.done [#allocation5], 16
    $region73: #{tpu_custom_call.1} parent=1 // pred_fallthru
      _
    %105 = sfence
    %v106 = vld [vmem:[#allocation2] sm:$0xff]
    %v107 = vld [vmem:[#allocation2 + $0x8] sm:$0xff]
    %v108 = vld [vmem:[#allocation2 + $0x10] sm:$0xff]
    %v109 = vld [vmem:[#allocation2 + $0x18] sm:$0xff]
    %v110 = vld [vmem:[#allocation6] sm:$0xff]
    %v111 = vld [vmem:[#allocation6 + $0x8] sm:$0xff]
    %v112 = vld [vmem:[#allocation6 + $0x10] sm:$0xff]
    %v113 = vld [vmem:[#allocation6 + $0x18] sm:$0xff]
    %v114 = vld [vmem:[#allocation6 + $0x20] sm:$0x1]
    %v115 = vld [vmem:[#allocation6 + $0x28] sm:$0x1]
    %v116 = vld [vmem:[#allocation6 + $0x30] sm:$0x1]
    %v117 = vld [vmem:[#allocation6 + $0x38] sm:$0x1]
    %v118 = vld [vmem:[#allocation8] sm:$0xff]
    %v119 = vld [vmem:[#allocation8 + $0x8] sm:$0xff]
    %v120 = vld [vmem:[#allocation8 + $0x10] sm:$0xff]
    %v121 = vld [vmem:[#allocation8 + $0x18] sm:$0xff]
    %v122 = vld [vmem:[#allocation8 + $0x20] sm:$0x1]
    %v123 = vld [vmem:[#allocation8 + $0x28] sm:$0x1]
    %v124 = vld [vmem:[#allocation8 + $0x30] sm:$0x1]
    %v125 = vld [vmem:[#allocation8 + $0x38] sm:$0x1]
    %127 = vrot.lane.b32.xlu0 %v109, 17
    %v128 = vpop.permute.xlu0 %127
    %133 = vrot.lane.b32.xlu0 %v106, 17
    %v134 = vpop.permute.xlu0 %133
    %135 = vrot.lane.b32.xlu0 %v107, 17
    %v136 = vpop.permute.xlu0 %135
    %137 = vrot.lane.b32.xlu0 %v108, 17
    %v138 = vpop.permute.xlu0 %137
    %vm139 = vcmask 138240
    %v140 = vsel %vm139, %v134, %v136
    %v141 = vsel %vm139, %v136, %v138
    %v142 = vsel %vm139, %v138, %v128
    %v147 = vsel %vm139, %v128, %v134
    %v148 = vperm.slane %v110, 0
    %v149 = vperm.slane %v111, 0
    %v150 = vperm.slane %v112, 0
    %v151 = vperm.slane %v113, 0
    %v152 = vmul.f32 %v147, %v148
    %v153 = vmul.f32 %v140, %v149
    %v154 = vmul.f32 %v141, %v150
    %v155 = vmul.f32 %v142, %v151
    %156 = vrot.lane.b32.xlu0 %v109, 16
    %v157 = vpop.permute.xlu0 %156
    %159 = vrot.lane.b32.xlu0 %v106, 16
    %v160 = vpop.permute.xlu0 %159
    %161 = vrot.lane.b32.xlu0 %v107, 16
    %v162 = vpop.permute.xlu0 %161
    %163 = vrot.lane.b32.xlu0 %v108, 16
    %v164 = vpop.permute.xlu0 %163
    %vm165 = vcmask 130048
    %v166 = vsel %vm165, %v160, %v162
    %v167 = vsel %vm165, %v162, %v164
    %v168 = vsel %vm165, %v164, %v157
    %v173 = vsel %vm165, %v157, %v160
    %v174 = vperm.slane %v110, 1
    %v175 = vperm.slane %v111, 1
    %v176 = vperm.slane %v112, 1
    %v177 = vperm.slane %v113, 1
    %v178 = vmul.f32 %v173, %v174
    %v179 = vmul.f32 %v166, %v175
    %v180 = vmul.f32 %v167, %v176
    %v181 = vmul.f32 %v168, %v177
    %182 = vrot.lane.b32.xlu0 %v109, 15
    %v183 = vpop.permute.xlu0 %182
    %185 = vrot.lane.b32.xlu0 %v106, 15
    %v186 = vpop.permute.xlu0 %185
    %187 = vrot.lane.b32.xlu0 %v107, 15
    %v188 = vpop.permute.xlu0 %187
    %189 = vrot.lane.b32.xlu0 %v108, 15
    %v190 = vpop.permute.xlu0 %189
    %vm191 = vcmask 121856
    %v192 = vsel %vm191, %v186, %v188
    %v193 = vsel %vm191, %v188, %v190
    %v194 = vsel %vm191, %v190, %v183
    %v199 = vsel %vm191, %v183, %v186
    %v200 = vperm.slane %v110, 2
    %v201 = vperm.slane %v111, 2
    %v202 = vperm.slane %v112, 2
    %v203 = vperm.slane %v113, 2
    %v204 = vmul.f32 %v199, %v200
    %v205 = vmul.f32 %v192, %v201
    %v206 = vmul.f32 %v193, %v202
    %v207 = vmul.f32 %v194, %v203
    %208 = vrot.lane.b32.xlu0 %v109, 1
    %v209 = vpop.permute.xlu0 %208
    %211 = vrot.lane.b32.xlu0 %v106, 1
    %v212 = vpop.permute.xlu0 %211
    %213 = vrot.lane.b32.xlu0 %v107, 1
    %v214 = vpop.permute.xlu0 %213
    %215 = vrot.lane.b32.xlu0 %v108, 1
    %v216 = vpop.permute.xlu0 %215
    %vm217 = vcmask 7168
    %v218 = vsel %vm217, %v212, %v214
    %v219 = vsel %vm217, %v214, %v216
    %v220 = vsel %vm217, %v216, %v209
    %v225 = vsel %vm217, %v209, %v212
    %v226 = vperm.slane %v110, 3
    %v227 = vperm.slane %v111, 3
    %v228 = vperm.slane %v112, 3
    %v229 = vperm.slane %v113, 3
    %v230 = vmul.f32 %v225, %v226
    %v231 = vmul.f32 %v218, %v227
    %v232 = vmul.f32 %v219, %v228
    %v233 = vmul.f32 %v220, %v229
    %234 = vrot.lane.b32.xlu0 %v106, 127
    %v235 = vpop.permute.xlu0 %234
    %236 = vrot.lane.b32.xlu0 %v107, 127
    %v237 = vpop.permute.xlu0 %236
    %238 = vrot.lane.b32.xlu0 %v108, 127
    %v239 = vpop.permute.xlu0 %238
    %240 = vrot.lane.b32.xlu0 %v109, 127
    %v241 = vpop.permute.xlu0 %240
    %vm242 = vcmask 1039360
    %v243 = vsel %vm242, %v235, %v237
    %v244 = vsel %vm242, %v237, %v239
    %v245 = vsel %vm242, %v239, %v241
    %v251 = vsel %vm242, %v241, %v235
    %v252 = vperm.slane %v110, 5
    %v253 = vperm.slane %v111, 5
    %v254 = vperm.slane %v112, 5
    %v255 = vperm.slane %v113, 5
    %v256 = vmul.f32 %v243, %v252
    %v257 = vmul.f32 %v244, %v253
    %v258 = vmul.f32 %v245, %v254
    %v259 = vmul.f32 %v251, %v255
    %260 = vrot.lane.b32.xlu0 %v106, 113
    %v261 = vpop.permute.xlu0 %260
    %262 = vrot.lane.b32.xlu0 %v107, 113
    %v263 = vpop.permute.xlu0 %262
    %264 = vrot.lane.b32.xlu0 %v108, 113
    %v265 = vpop.permute.xlu0 %264
    %266 = vrot.lane.b32.xlu0 %v109, 113
    %v267 = vpop.permute.xlu0 %266
    %vm268 = vcmask 924672
    %v269 = vsel %vm268, %v261, %v263
    %v270 = vsel %vm268, %v263, %v265
    %v271 = vsel %vm268, %v265, %v267
    %v277 = vsel %vm268, %v267, %v261
    %v278 = vperm.slane %v110, 6
    %v279 = vperm.slane %v111, 6
    %v280 = vperm.slane %v112, 6
    %v281 = vperm.slane %v113, 6
    %v282 = vmul.f32 %v269, %v278
    %v283 = vmul.f32 %v270, %v279
    %v284 = vmul.f32 %v271, %v280
    %v285 = vmul.f32 %v277, %v281
    %286 = vrot.lane.b32.xlu0 %v106, 112
    %v287 = vpop.permute.xlu0 %286
    %288 = vrot.lane.b32.xlu0 %v107, 112
    %v289 = vpop.permute.xlu0 %288
    %290 = vrot.lane.b32.xlu0 %v108, 112
    %v291 = vpop.permute.xlu0 %290
    %292 = vrot.lane.b32.xlu0 %v109, 112
    %v293 = vpop.permute.xlu0 %292
    %vm294 = vcmask 916480
    %v295 = vsel %vm294, %v287, %v289
    %v296 = vsel %vm294, %v289, %v291
    %v297 = vsel %vm294, %v291, %v293
    %v303 = vsel %vm294, %v293, %v287
    %v304 = vperm.slane %v110, 7
    %v305 = vperm.slane %v111, 7
    %v306 = vperm.slane %v112, 7
    %v307 = vperm.slane %v113, 7
    %v308 = vmul.f32 %v295, %v304
    %v309 = vmul.f32 %v296, %v305
    %v310 = vmul.f32 %v297, %v306
    %v311 = vmul.f32 %v303, %v307
    %312 = vrot.lane.b32.xlu0 %v106, 111
    %v313 = vpop.permute.xlu0 %312
    %314 = vrot.lane.b32.xlu0 %v107, 111
    %v315 = vpop.permute.xlu0 %314
    %316 = vrot.lane.b32.xlu0 %v108, 111
    %v317 = vpop.permute.xlu0 %316
    %318 = vrot.lane.b32.xlu0 %v109, 111
    %v319 = vpop.permute.xlu0 %318
    %vm320 = vcmask 908288
    %v321 = vsel %vm320, %v313, %v315
    %v322 = vsel %vm320, %v315, %v317
    %v323 = vsel %vm320, %v317, %v319
    %v329 = vsel %vm320, %v319, %v313
    %v330 = vperm.slane %v114, 0
    %v331 = vperm.slane %v115, 0
    %v332 = vperm.slane %v116, 0
    %v333 = vperm.slane %v117, 0
    %v334 = vmul.f32 %v321, %v330
    %v335 = vmul.f32 %v322, %v331
    %v336 = vmul.f32 %v323, %v332
    %v337 = vmul.f32 %v329, %v333
    %v338 = vld [vmem:[%s3] sm:$0xff]
    %v339 = vld [vmem:[%s4] sm:$0xff]
    %341 = vset.pattern.permute.xlu0 0
    %342 = vperm.xlu0 %341, %v339
    %v343 = vpop.permute.xlu0 %342
    %vm345 = vcmask 588800
    %v347 = vsel %vm345, %v338, 0
    %349 = vmatpush.msra.mxu0 0.0
    %350 = vmatpush.msra.mxu0 0.0
    %351 = vmatpush.msra.mxu0 0.0
    %352 = vmatpush.msra.mxu0 0.0
    %353 = vmatpush.msra.mxu0 0.0
    %354 = vmatpush.msra.mxu0 0.0
    %355 = vmatpush.msra.mxu0 0.0
    %356 = vmatpush.msra.mxu0 %v334
    %357 = vmatpush.msra.mxu0 %v308
    %358 = vmatpush.msra.mxu0 %v282
    %359 = vmatpush.msra.mxu0 %v256
    %360 = vmatpush.msra.mxu0 %v106
    %361 = vmatpush.msra.mxu0 %v230
    %362 = vmatpush.msra.mxu0 %v204
    %363 = vmatpush.msra.mxu0 %v178
    %364 = vmatpush.msra.mxu0 %v152
    %365 = vmatmul.f32.gmra.mxu0 %v347
    %v366 = vpop.f32.mrf.mxu0
    %v367 = vadd.f32 %v343, %v366
    %368 = vdwg.mxu0
    %369 = vmatpush.msra.mxu0 0.0
    %370 = vmatpush.msra.mxu0 0.0
    %371 = vmatpush.msra.mxu0 0.0
    %372 = vmatpush.msra.mxu0 0.0
    %373 = vmatpush.msra.mxu0 0.0
    %374 = vmatpush.msra.mxu0 0.0
    %375 = vmatpush.msra.mxu0 0.0
    %376 = vmatpush.msra.mxu0 %v335
    %377 = vmatpush.msra.mxu0 %v309
    %378 = vmatpush.msra.mxu0 %v283
    %379 = vmatpush.msra.mxu0 %v257
    %380 = vmatpush.msra.mxu0 %v107
    %381 = vmatpush.msra.mxu0 %v231
    %382 = vmatpush.msra.mxu0 %v205
    %383 = vmatpush.msra.mxu0 %v179
    %384 = vmatpush.msra.mxu0 %v153
    %385 = vmatmul.f32.gmra.mxu0 %v347
    %v386 = vpop.f32.mrf.mxu0
    %v387 = vadd.f32 %v343, %v386
    %388 = vdwg.mxu0
    %389 = vmatpush.msra.mxu0 0.0
    %390 = vmatpush.msra.mxu0 0.0
    %391 = vmatpush.msra.mxu0 0.0
    %392 = vmatpush.msra.mxu0 0.0
    %393 = vmatpush.msra.mxu0 0.0
    %394 = vmatpush.msra.mxu0 0.0
    %395 = vmatpush.msra.mxu0 0.0
    %396 = vmatpush.msra.mxu0 %v336
    %397 = vmatpush.msra.mxu0 %v310
    %398 = vmatpush.msra.mxu0 %v284
    %399 = vmatpush.msra.mxu0 %v258
    %400 = vmatpush.msra.mxu0 %v108
    %401 = vmatpush.msra.mxu0 %v232
    %402 = vmatpush.msra.mxu0 %v206
    %403 = vmatpush.msra.mxu0 %v180
    %404 = vmatpush.msra.mxu0 %v154
    %405 = vmatmul.f32.gmra.mxu0 %v347
    %v406 = vpop.f32.mrf.mxu0
    %v407 = vadd.f32 %v343, %v406
    %408 = vdwg.mxu0
    %409 = vmatpush.msra.mxu0 0.0
    %410 = vmatpush.msra.mxu0 0.0
    %411 = vmatpush.msra.mxu0 0.0
    %412 = vmatpush.msra.mxu0 0.0
    %413 = vmatpush.msra.mxu0 0.0
    %414 = vmatpush.msra.mxu0 0.0
    %415 = vmatpush.msra.mxu0 0.0
    %416 = vmatpush.msra.mxu0 %v337
    %417 = vmatpush.msra.mxu0 %v311
    %418 = vmatpush.msra.mxu0 %v285
    %419 = vmatpush.msra.mxu0 %v259
    %420 = vmatpush.msra.mxu0 %v109
    %421 = vmatpush.msra.mxu0 %v233
    %422 = vmatpush.msra.mxu0 %v207
    %423 = vmatpush.msra.mxu0 %v181
    %424 = vmatpush.msra.mxu0 %v155
    %425 = vmatmul.f32.gmra.mxu0 %v347
    %v426 = vpop.f32.mrf.mxu0
    %v427 = vadd.f32 %v343, %v426
    %428 = vdwg.mxu0
    %430 = vrot.lane.b32.xlu0 %v427, 17
    %v431 = vpop.permute.xlu0 %430
    %436 = vrot.lane.b32.xlu0 %v367, 17
    %v437 = vpop.permute.xlu0 %436
    %438 = vrot.lane.b32.xlu0 %v387, 17
    %v439 = vpop.permute.xlu0 %438
    %440 = vrot.lane.b32.xlu0 %v407, 17
    %v441 = vpop.permute.xlu0 %440
    %v442 = vsel %vm139, %v437, %v439
    %v443 = vsel %vm139, %v439, %v441
    %v444 = vsel %vm139, %v441, %v431
    %v449 = vsel %vm139, %v431, %v437
    %vm450 = vcmp.gt.f32.partialorder %v110, 0.5
    %vm451 = vcmp.gt.f32.partialorder %v111, 0.5
    %vm452 = vcmp.gt.f32.partialorder %v112, 0.5
    %vm453 = vcmp.gt.f32.partialorder %v113, 0.5
    %v454 = vsel %vm450, 1, 0
    %v455 = vsel %vm451, 1, 0
    %v456 = vsel %vm452, 1, 0
    %v457 = vsel %vm453, 1, 0
    %v458 = vperm.slane %v454, 0
    %v459 = vperm.slane %v455, 0
    %v460 = vperm.slane %v456, 0
    %v461 = vperm.slane %v457, 0
    %vm462 = vcmp.eq.s32.totalorder %v458, 1
    %vm463 = vcmp.eq.s32.totalorder %v459, 1
    %vm464 = vcmp.eq.s32.totalorder %v460, 1
    %vm465 = vcmp.eq.s32.totalorder %v461, 1
    %v466 = vsel %vm462, %v449, -1e+30
    %v467 = vsel %vm463, %v442, -1e+30
    %v468 = vsel %vm464, %v443, -1e+30
    %v469 = vsel %vm465, %v444, -1e+30
    %v470 = vmax.f32 %v367, %v466
    %v471 = vmax.f32 %v387, %v467
    %v472 = vmax.f32 %v407, %v468
    %v473 = vmax.f32 %v427, %v469
    %474 = vrot.lane.b32.xlu0 %v427, 16
    %v475 = vpop.permute.xlu0 %474
    %477 = vrot.lane.b32.xlu0 %v367, 16
    %v478 = vpop.permute.xlu0 %477
    %479 = vrot.lane.b32.xlu0 %v387, 16
    %v480 = vpop.permute.xlu0 %479
    %481 = vrot.lane.b32.xlu0 %v407, 16
    %v482 = vpop.permute.xlu0 %481
    %v483 = vsel %vm165, %v478, %v480
    %v484 = vsel %vm165, %v480, %v482
    %v485 = vsel %vm165, %v482, %v475
    %v490 = vsel %vm165, %v475, %v478
    %v491 = vperm.slane %v454, 1
    %v492 = vperm.slane %v455, 1
    %v493 = vperm.slane %v456, 1
    %v494 = vperm.slane %v457, 1
    %vm495 = vcmp.eq.s32.totalorder %v491, 1
    %vm496 = vcmp.eq.s32.totalorder %v492, 1
    %vm497 = vcmp.eq.s32.totalorder %v493, 1
    %vm498 = vcmp.eq.s32.totalorder %v494, 1
    %v499 = vsel %vm495, %v490, -1e+30
    %v500 = vsel %vm496, %v483, -1e+30
    %v501 = vsel %vm497, %v484, -1e+30
    %v502 = vsel %vm498, %v485, -1e+30
    %v503 = vmax.f32 %v470, %v499
    %v504 = vmax.f32 %v471, %v500
    %v505 = vmax.f32 %v472, %v501
    %v506 = vmax.f32 %v473, %v502
    %507 = vrot.lane.b32.xlu0 %v427, 15
    %v508 = vpop.permute.xlu0 %507
    %510 = vrot.lane.b32.xlu0 %v367, 15
    %v511 = vpop.permute.xlu0 %510
    %512 = vrot.lane.b32.xlu0 %v387, 15
    %v513 = vpop.permute.xlu0 %512
    %514 = vrot.lane.b32.xlu0 %v407, 15
    %v515 = vpop.permute.xlu0 %514
    %v516 = vsel %vm191, %v511, %v513
    %v517 = vsel %vm191, %v513, %v515
    %v518 = vsel %vm191, %v515, %v508
    %v523 = vsel %vm191, %v508, %v511
    %v524 = vperm.slane %v454, 2
    %v525 = vperm.slane %v455, 2
    %v526 = vperm.slane %v456, 2
    %v527 = vperm.slane %v457, 2
    %vm528 = vcmp.eq.s32.totalorder %v524, 1
    %vm529 = vcmp.eq.s32.totalorder %v525, 1
    %vm530 = vcmp.eq.s32.totalorder %v526, 1
    %vm531 = vcmp.eq.s32.totalorder %v527, 1
    %v532 = vsel %vm528, %v523, -1e+30
    %v533 = vsel %vm529, %v516, -1e+30
    %v534 = vsel %vm530, %v517, -1e+30
    %v535 = vsel %vm531, %v518, -1e+30
    %v536 = vmax.f32 %v503, %v532
    %v537 = vmax.f32 %v504, %v533
    %v538 = vmax.f32 %v505, %v534
    %v539 = vmax.f32 %v506, %v535
    %540 = vrot.lane.b32.xlu0 %v427, 1
    %v541 = vpop.permute.xlu0 %540
    %543 = vrot.lane.b32.xlu0 %v367, 1
    %v544 = vpop.permute.xlu0 %543
    %545 = vrot.lane.b32.xlu0 %v387, 1
    %v546 = vpop.permute.xlu0 %545
    %547 = vrot.lane.b32.xlu0 %v407, 1
    %v548 = vpop.permute.xlu0 %547
    %v549 = vsel %vm217, %v544, %v546
    %v550 = vsel %vm217, %v546, %v548
    %v551 = vsel %vm217, %v548, %v541
    %v556 = vsel %vm217, %v541, %v544
    %v557 = vperm.slane %v454, 3
    %v558 = vperm.slane %v455, 3
    %v559 = vperm.slane %v456, 3
    %v560 = vperm.slane %v457, 3
    %vm561 = vcmp.eq.s32.totalorder %v557, 1
    %vm562 = vcmp.eq.s32.totalorder %v558, 1
    %vm563 = vcmp.eq.s32.totalorder %v559, 1
    %vm564 = vcmp.eq.s32.totalorder %v560, 1
    %v565 = vsel %vm561, %v556, -1e+30
    %v566 = vsel %vm562, %v549, -1e+30
    %v567 = vsel %vm563, %v550, -1e+30
    %v568 = vsel %vm564, %v551, -1e+30
    %v569 = vmax.f32 %v536, %v565
    %v570 = vmax.f32 %v537, %v566
    %v571 = vmax.f32 %v538, %v567
    %v572 = vmax.f32 %v539, %v568
    %573 = vrot.lane.b32.xlu0 %v367, 127
    %v574 = vpop.permute.xlu0 %573
    %575 = vrot.lane.b32.xlu0 %v387, 127
    %v576 = vpop.permute.xlu0 %575
    %577 = vrot.lane.b32.xlu0 %v407, 127
    %v578 = vpop.permute.xlu0 %577
    %579 = vrot.lane.b32.xlu0 %v427, 127
    %v580 = vpop.permute.xlu0 %579
    %v581 = vsel %vm242, %v574, %v576
    %v582 = vsel %vm242, %v576, %v578
    %v583 = vsel %vm242, %v578, %v580
    %v589 = vsel %vm242, %v580, %v574
    %v590 = vperm.slane %v454, 5
    %v591 = vperm.slane %v455, 5
    %v592 = vperm.slane %v456, 5
    %v593 = vperm.slane %v457, 5
    %vm594 = vcmp.eq.s32.totalorder %v590, 1
    %vm595 = vcmp.eq.s32.totalorder %v591, 1
    %vm596 = vcmp.eq.s32.totalorder %v592, 1
    %vm597 = vcmp.eq.s32.totalorder %v593, 1
    %v598 = vsel %vm594, %v581, -1e+30
    %v599 = vsel %vm595, %v582, -1e+30
    %v600 = vsel %vm596, %v583, -1e+30
    %v601 = vsel %vm597, %v589, -1e+30
    %v602 = vmax.f32 %v569, %v598
    %v603 = vmax.f32 %v570, %v599
    %v604 = vmax.f32 %v571, %v600
    %v605 = vmax.f32 %v572, %v601
    %606 = vrot.lane.b32.xlu0 %v367, 113
    %v607 = vpop.permute.xlu0 %606
    %608 = vrot.lane.b32.xlu0 %v387, 113
    %v609 = vpop.permute.xlu0 %608
    %610 = vrot.lane.b32.xlu0 %v407, 113
    %v611 = vpop.permute.xlu0 %610
    %612 = vrot.lane.b32.xlu0 %v427, 113
    %v613 = vpop.permute.xlu0 %612
    %v614 = vsel %vm268, %v607, %v609
    %v615 = vsel %vm268, %v609, %v611
    %v616 = vsel %vm268, %v611, %v613
    %v622 = vsel %vm268, %v613, %v607
    %v623 = vperm.slane %v454, 6
    %v624 = vperm.slane %v455, 6
    %v625 = vperm.slane %v456, 6
    %v626 = vperm.slane %v457, 6
    %vm627 = vcmp.eq.s32.totalorder %v623, 1
    %vm628 = vcmp.eq.s32.totalorder %v624, 1
    %vm629 = vcmp.eq.s32.totalorder %v625, 1
    %vm630 = vcmp.eq.s32.totalorder %v626, 1
    %v631 = vsel %vm627, %v614, -1e+30
    %v632 = vsel %vm628, %v615, -1e+30
    %v633 = vsel %vm629, %v616, -1e+30
    %v634 = vsel %vm630, %v622, -1e+30
    %v635 = vmax.f32 %v602, %v631
    %v636 = vmax.f32 %v603, %v632
    %v637 = vmax.f32 %v604, %v633
    %v638 = vmax.f32 %v605, %v634
    %639 = vrot.lane.b32.xlu0 %v367, 112
    %v640 = vpop.permute.xlu0 %639
    %641 = vrot.lane.b32.xlu0 %v387, 112
    %v642 = vpop.permute.xlu0 %641
    %643 = vrot.lane.b32.xlu0 %v407, 112
    %v644 = vpop.permute.xlu0 %643
    %645 = vrot.lane.b32.xlu0 %v427, 112
    %v646 = vpop.permute.xlu0 %645
    %v647 = vsel %vm294, %v640, %v642
    %v648 = vsel %vm294, %v642, %v644
    %v649 = vsel %vm294, %v644, %v646
    %v655 = vsel %vm294, %v646, %v640
    %v656 = vperm.slane %v454, 7
    %v657 = vperm.slane %v455, 7
    %v658 = vperm.slane %v456, 7
    %v659 = vperm.slane %v457, 7
    %vm660 = vcmp.eq.s32.totalorder %v656, 1
    %vm661 = vcmp.eq.s32.totalorder %v657, 1
    %vm662 = vcmp.eq.s32.totalorder %v658, 1
    %vm663 = vcmp.eq.s32.totalorder %v659, 1
    %v664 = vsel %vm660, %v647, -1e+30
    %v665 = vsel %vm661, %v648, -1e+30
    %v666 = vsel %vm662, %v649, -1e+30
    %v667 = vsel %vm663, %v655, -1e+30
    %v668 = vmax.f32 %v635, %v664
    %v669 = vmax.f32 %v636, %v665
    %v670 = vmax.f32 %v637, %v666
    %v671 = vmax.f32 %v638, %v667
    %672 = vrot.lane.b32.xlu0 %v367, 111
    %v673 = vpop.permute.xlu0 %672
    %674 = vrot.lane.b32.xlu0 %v387, 111
    %v675 = vpop.permute.xlu0 %674
    %676 = vrot.lane.b32.xlu0 %v407, 111
    %v677 = vpop.permute.xlu0 %676
    %678 = vrot.lane.b32.xlu0 %v427, 111
    %v679 = vpop.permute.xlu0 %678
    %v680 = vsel %vm320, %v673, %v675
    %v681 = vsel %vm320, %v675, %v677
    %v682 = vsel %vm320, %v677, %v679
    %v688 = vsel %vm320, %v679, %v673
    %vm689 = vcmp.gt.f32.partialorder %v114, 0.5
    %vm690 = vcmp.gt.f32.partialorder %v115, 0.5
    %vm691 = vcmp.gt.f32.partialorder %v116, 0.5
    %vm692 = vcmp.gt.f32.partialorder %v117, 0.5
    %v693 = vsel %vm689, 1, 0
    %v694 = vsel %vm690, 1, 0
    %v695 = vsel %vm691, 1, 0
    %v696 = vsel %vm692, 1, 0
    %v697 = vperm.slane %v693, 0
    %v698 = vperm.slane %v694, 0
    %v699 = vperm.slane %v695, 0
    %v700 = vperm.slane %v696, 0
    %vm701 = vcmp.eq.s32.totalorder %v697, 1
    %vm702 = vcmp.eq.s32.totalorder %v698, 1
    %vm703 = vcmp.eq.s32.totalorder %v699, 1
    %vm704 = vcmp.eq.s32.totalorder %v700, 1
    %v705 = vsel %vm701, %v680, -1e+30
    %v706 = vsel %vm702, %v681, -1e+30
    %v707 = vsel %vm703, %v682, -1e+30
    %v708 = vsel %vm704, %v688, -1e+30
    %v709 = vmax.f32 %v668, %v705
    %v710 = vmax.f32 %v669, %v706
    %v711 = vmax.f32 %v670, %v707
    %v712 = vmax.f32 %v671, %v708
    %v713 = vmax.f32 %v709, 0.0
    %v714 = vmax.f32 %v710, 0.0
    %v715 = vmax.f32 %v711, 0.0
    %v716 = vmax.f32 %v712, 0.0
    %718 = vrot.lane.b32.xlu0 %v716, 34
    %v719 = vpop.permute.xlu0 %718
    %724 = vrot.lane.b32.xlu0 %v713, 34
    %v725 = vpop.permute.xlu0 %724
    %726 = vrot.lane.b32.xlu0 %v714, 34
    %v727 = vpop.permute.xlu0 %726
    %728 = vrot.lane.b32.xlu0 %v715, 34
    %v729 = vpop.permute.xlu0 %728
    %vm730 = vcmask 277504
    %v731 = vsel %vm730, %v725, %v727
    %v732 = vsel %vm730, %v727, %v729
    %v733 = vsel %vm730, %v729, %v719
    %v738 = vsel %vm730, %v719, %v725
    %v739 = vperm.slane %v118, 0
    %v740 = vperm.slane %v119, 0
    %v741 = vperm.slane %v120, 0
    %v742 = vperm.slane %v121, 0
    %v743 = vmul.f32 %v738, %v739
    %v744 = vmul.f32 %v731, %v740
    %v745 = vmul.f32 %v732, %v741
    %v746 = vmul.f32 %v733, %v742
    %747 = vrot.lane.b32.xlu0 %v716, 32
    %v748 = vpop.permute.xlu0 %747
    %750 = vrot.lane.b32.xlu0 %v713, 32
    %v751 = vpop.permute.xlu0 %750
    %752 = vrot.lane.b32.xlu0 %v714, 32
    %v753 = vpop.permute.xlu0 %752
    %754 = vrot.lane.b32.xlu0 %v715, 32
    %v755 = vpop.permute.xlu0 %754
    %vm756 = vcmask 261120
    %v757 = vsel %vm756, %v751, %v753
    %v758 = vsel %vm756, %v753, %v755
    %v759 = vsel %vm756, %v755, %v748
    %v764 = vsel %vm756, %v748, %v751
    %v765 = vperm.slane %v118, 1
    %v766 = vperm.slane %v119, 1
    %v767 = vperm.slane %v120, 1
    %v768 = vperm.slane %v121, 1
    %v769 = vmul.f32 %v764, %v765
    %v770 = vmul.f32 %v757, %v766
    %v771 = vmul.f32 %v758, %v767
    %v772 = vmul.f32 %v759, %v768
    %773 = vrot.lane.b32.xlu0 %v716, 30
    %v774 = vpop.permute.xlu0 %773
    %776 = vrot.lane.b32.xlu0 %v713, 30
    %v777 = vpop.permute.xlu0 %776
    %778 = vrot.lane.b32.xlu0 %v714, 30
    %v779 = vpop.permute.xlu0 %778
    %780 = vrot.lane.b32.xlu0 %v715, 30
    %v781 = vpop.permute.xlu0 %780
    %vm782 = vcmask 244736
    %v783 = vsel %vm782, %v777, %v779
    %v784 = vsel %vm782, %v779, %v781
    %v785 = vsel %vm782, %v781, %v774
    %v790 = vsel %vm782, %v774, %v777
    %v791 = vperm.slane %v118, 2
    %v792 = vperm.slane %v119, 2
    %v793 = vperm.slane %v120, 2
    %v794 = vperm.slane %v121, 2
    %v795 = vmul.f32 %v790, %v791
    %v796 = vmul.f32 %v783, %v792
    %v797 = vmul.f32 %v784, %v793
    %v798 = vmul.f32 %v785, %v794
    %799 = vrot.lane.b32.xlu0 %v716, 2
    %v800 = vpop.permute.xlu0 %799
    %802 = vrot.lane.b32.xlu0 %v713, 2
    %v803 = vpop.permute.xlu0 %802
    %804 = vrot.lane.b32.xlu0 %v714, 2
    %v805 = vpop.permute.xlu0 %804
    %806 = vrot.lane.b32.xlu0 %v715, 2
    %v807 = vpop.permute.xlu0 %806
    %vm808 = vcmask 15360
    %v809 = vsel %vm808, %v803, %v805
    %v810 = vsel %vm808, %v805, %v807
    %v811 = vsel %vm808, %v807, %v800
    %v816 = vsel %vm808, %v800, %v803
    %v817 = vperm.slane %v118, 3
    %v818 = vperm.slane %v119, 3
    %v819 = vperm.slane %v120, 3
    %v820 = vperm.slane %v121, 3
    %v821 = vmul.f32 %v816, %v817
    %v822 = vmul.f32 %v809, %v818
    %v823 = vmul.f32 %v810, %v819
    %v824 = vmul.f32 %v811, %v820
    %825 = vrot.lane.b32.xlu0 %v713, 126
    %v826 = vpop.permute.xlu0 %825
    %827 = vrot.lane.b32.xlu0 %v714, 126
    %v828 = vpop.permute.xlu0 %827
    %829 = vrot.lane.b32.xlu0 %v715, 126
    %v830 = vpop.permute.xlu0 %829
    %831 = vrot.lane.b32.xlu0 %v716, 126
    %v832 = vpop.permute.xlu0 %831
    %vm833 = vcmask 1031168
    %v834 = vsel %vm833, %v826, %v828
    %v835 = vsel %vm833, %v828, %v830
    %v836 = vsel %vm833, %v830, %v832
    %v842 = vsel %vm833, %v832, %v826
    %v843 = vperm.slane %v118, 5
    %v844 = vperm.slane %v119, 5
    %v845 = vperm.slane %v120, 5
    %v846 = vperm.slane %v121, 5
    %v847 = vmul.f32 %v834, %v843
    %v848 = vmul.f32 %v835, %v844
    %v849 = vmul.f32 %v836, %v845
    %v850 = vmul.f32 %v842, %v846
    %851 = vrot.lane.b32.xlu0 %v713, 98
    %v852 = vpop.permute.xlu0 %851
    %853 = vrot.lane.b32.xlu0 %v714, 98
    %v854 = vpop.permute.xlu0 %853
    %855 = vrot.lane.b32.xlu0 %v715, 98
    %v856 = vpop.permute.xlu0 %855
    %857 = vrot.lane.b32.xlu0 %v716, 98
    %v858 = vpop.permute.xlu0 %857
    %vm859 = vcmask 801792
    %v860 = vsel %vm859, %v852, %v854
    %v861 = vsel %vm859, %v854, %v856
    %v862 = vsel %vm859, %v856, %v858
    %v868 = vsel %vm859, %v858, %v852
    %v869 = vperm.slane %v118, 6
    %v870 = vperm.slane %v119, 6
    %v871 = vperm.slane %v120, 6
    %v872 = vperm.slane %v121, 6
    %v873 = vmul.f32 %v860, %v869
    %v874 = vmul.f32 %v861, %v870
    %v875 = vmul.f32 %v862, %v871
    %v876 = vmul.f32 %v868, %v872
    %877 = vrot.lane.b32.xlu0 %v713, 96
    %v878 = vpop.permute.xlu0 %877
    %879 = vrot.lane.b32.xlu0 %v714, 96
    %v880 = vpop.permute.xlu0 %879
    %881 = vrot.lane.b32.xlu0 %v715, 96
    %v882 = vpop.permute.xlu0 %881
    %883 = vrot.lane.b32.xlu0 %v716, 96
    %v884 = vpop.permute.xlu0 %883
    %vm885 = vcmask 785408
    %v886 = vsel %vm885, %v878, %v880
    %v887 = vsel %vm885, %v880, %v882
    %v888 = vsel %vm885, %v882, %v884
    %v894 = vsel %vm885, %v884, %v878
    %v895 = vperm.slane %v118, 7
    %v896 = vperm.slane %v119, 7
    %v897 = vperm.slane %v120, 7
    %v898 = vperm.slane %v121, 7
    %v899 = vmul.f32 %v886, %v895
    %v900 = vmul.f32 %v887, %v896
    %v901 = vmul.f32 %v888, %v897
    %v902 = vmul.f32 %v894, %v898
    %903 = vrot.lane.b32.xlu0 %v713, 94
    %v904 = vpop.permute.xlu0 %903
    %905 = vrot.lane.b32.xlu0 %v714, 94
    %v906 = vpop.permute.xlu0 %905
    %907 = vrot.lane.b32.xlu0 %v715, 94
    %v908 = vpop.permute.xlu0 %907
    %909 = vrot.lane.b32.xlu0 %v716, 94
    %v910 = vpop.permute.xlu0 %909
    %vm911 = vcmask 769024
    %v912 = vsel %vm911, %v904, %v906
    %v913 = vsel %vm911, %v906, %v908
    %v914 = vsel %vm911, %v908, %v910
    %v920 = vsel %vm911, %v910, %v904
    %v921 = vperm.slane %v122, 0
    %v922 = vperm.slane %v123, 0
    %v923 = vperm.slane %v124, 0
    %v924 = vperm.slane %v125, 0
    %v925 = vmul.f32 %v912, %v921
    %v926 = vmul.f32 %v913, %v922
    %v927 = vmul.f32 %v914, %v923
    %v928 = vmul.f32 %v920, %v924
    %v929 = vld [vmem:[%s5] sm:$0xff]
    %v930 = vld [vmem:[%s6] sm:$0xff]
    %932 = vset.pattern.permute.xlu0 0
    %933 = vperm.xlu0 %932, %v930
    %v934 = vpop.permute.xlu0 %933
    %v937 = vsel %vm345, %v929, 0
    %939 = vmatpush.msra.mxu0 0.0
    %940 = vmatpush.msra.mxu0 0.0
    %941 = vmatpush.msra.mxu0 0.0
    %942 = vmatpush.msra.mxu0 0.0
    %943 = vmatpush.msra.mxu0 0.0
    %944 = vmatpush.msra.mxu0 0.0
    %945 = vmatpush.msra.mxu0 0.0
    %946 = vmatpush.msra.mxu0 %v925
    %947 = vmatpush.msra.mxu0 %v899
    %948 = vmatpush.msra.mxu0 %v873
    %949 = vmatpush.msra.mxu0 %v847
    %950 = vmatpush.msra.mxu0 %v713
    %951 = vmatpush.msra.mxu0 %v821
    %952 = vmatpush.msra.mxu0 %v795
    %953 = vmatpush.msra.mxu0 %v769
    %954 = vmatpush.msra.mxu0 %v743
    %955 = vmatmul.f32.gmra.mxu0 %v937
    %v956 = vpop.f32.mrf.mxu0
    %v957 = vadd.f32 %v934, %v956
    %958 = vdwg.mxu0
    %959 = vmatpush.msra.mxu0 0.0
    %960 = vmatpush.msra.mxu0 0.0
    %961 = vmatpush.msra.mxu0 0.0
    %962 = vmatpush.msra.mxu0 0.0
    %963 = vmatpush.msra.mxu0 0.0
    %964 = vmatpush.msra.mxu0 0.0
    %965 = vmatpush.msra.mxu0 0.0
    %966 = vmatpush.msra.mxu0 %v926
    %967 = vmatpush.msra.mxu0 %v900
    %968 = vmatpush.msra.mxu0 %v874
    %969 = vmatpush.msra.mxu0 %v848
    %970 = vmatpush.msra.mxu0 %v714
    %971 = vmatpush.msra.mxu0 %v822
    %972 = vmatpush.msra.mxu0 %v796
    %973 = vmatpush.msra.mxu0 %v770
    %974 = vmatpush.msra.mxu0 %v744
    %975 = vmatmul.f32.gmra.mxu0 %v937
    %v976 = vpop.f32.mrf.mxu0
    %v977 = vadd.f32 %v934, %v976
    %978 = vdwg.mxu0
    %979 = vmatpush.msra.mxu0 0.0
    %980 = vmatpush.msra.mxu0 0.0
    %981 = vmatpush.msra.mxu0 0.0
    %982 = vmatpush.msra.mxu0 0.0
    %983 = vmatpush.msra.mxu0 0.0
    %984 = vmatpush.msra.mxu0 0.0
    %985 = vmatpush.msra.mxu0 0.0
    %986 = vmatpush.msra.mxu0 %v927
    %987 = vmatpush.msra.mxu0 %v901
    %988 = vmatpush.msra.mxu0 %v875
    %989 = vmatpush.msra.mxu0 %v849
    %990 = vmatpush.msra.mxu0 %v715
    %991 = vmatpush.msra.mxu0 %v823
    %992 = vmatpush.msra.mxu0 %v797
    %993 = vmatpush.msra.mxu0 %v771
    %994 = vmatpush.msra.mxu0 %v745
    %995 = vmatmul.f32.gmra.mxu0 %v937
    %v996 = vpop.f32.mrf.mxu0
    %v997 = vadd.f32 %v934, %v996
    %998 = vdwg.mxu0
    %999 = vmatpush.msra.mxu0 0.0
    %1000 = vmatpush.msra.mxu0 0.0
    %1001 = vmatpush.msra.mxu0 0.0
    %1002 = vmatpush.msra.mxu0 0.0
    %1003 = vmatpush.msra.mxu0 0.0
    %1004 = vmatpush.msra.mxu0 0.0
    %1005 = vmatpush.msra.mxu0 0.0
    %1006 = vmatpush.msra.mxu0 %v928
    %1007 = vmatpush.msra.mxu0 %v902
    %1008 = vmatpush.msra.mxu0 %v876
    %1009 = vmatpush.msra.mxu0 %v850
    %1010 = vmatpush.msra.mxu0 %v716
    %1011 = vmatpush.msra.mxu0 %v824
    %1012 = vmatpush.msra.mxu0 %v798
    %1013 = vmatpush.msra.mxu0 %v772
    %1014 = vmatpush.msra.mxu0 %v746
    %1015 = vmatmul.f32.gmra.mxu0 %v937
    %v1016 = vpop.f32.mrf.mxu0
    %v1017 = vadd.f32 %v934, %v1016
    %1018 = vdwg.mxu0
    %v1019 = vmax.f32 %v957, 0.0
    %v1020 = vmax.f32 %v977, 0.0
    %v1021 = vmax.f32 %v997, 0.0
    %v1022 = vmax.f32 %v1017, 0.0
    %1024 = vrot.lane.b32.xlu0 %v1022, 34
    %v1025 = vpop.permute.xlu0 %1024
    %1030 = vrot.lane.b32.xlu0 %v1019, 34
    %v1031 = vpop.permute.xlu0 %1030
    %1032 = vrot.lane.b32.xlu0 %v1020, 34
    %v1033 = vpop.permute.xlu0 %1032
    %1034 = vrot.lane.b32.xlu0 %v1021, 34
    %v1035 = vpop.permute.xlu0 %1034
    %v1036 = vsel %vm730, %v1031, %v1033
    %v1037 = vsel %vm730, %v1033, %v1035
    %v1038 = vsel %vm730, %v1035, %v1025
    %v1043 = vsel %vm730, %v1025, %v1031
    %v1044 = vmul.f32 %v1043, %v739
    %v1045 = vmul.f32 %v1036, %v740
    %v1046 = vmul.f32 %v1037, %v741
    %v1047 = vmul.f32 %v1038, %v742
    %1048 = vrot.lane.b32.xlu0 %v1022, 32
    %v1049 = vpop.permute.xlu0 %1048
    %1051 = vrot.lane.b32.xlu0 %v1019, 32
    %v1052 = vpop.permute.xlu0 %1051
    %1053 = vrot.lane.b32.xlu0 %v1020, 32
    %v1054 = vpop.permute.xlu0 %1053
    %1055 = vrot.lane.b32.xlu0 %v1021, 32
    %v1056 = vpop.permute.xlu0 %1055
    %v1057 = vsel %vm756, %v1052, %v1054
    %v1058 = vsel %vm756, %v1054, %v1056
    %v1059 = vsel %vm756, %v1056, %v1049
    %v1064 = vsel %vm756, %v1049, %v1052
    %v1065 = vmul.f32 %v1064, %v765
    %v1066 = vmul.f32 %v1057, %v766
    %v1067 = vmul.f32 %v1058, %v767
    %v1068 = vmul.f32 %v1059, %v768
    %1069 = vrot.lane.b32.xlu0 %v1022, 30
    %v1070 = vpop.permute.xlu0 %1069
    %1072 = vrot.lane.b32.xlu0 %v1019, 30
    %v1073 = vpop.permute.xlu0 %1072
    %1074 = vrot.lane.b32.xlu0 %v1020, 30
    %v1075 = vpop.permute.xlu0 %1074
    %1076 = vrot.lane.b32.xlu0 %v1021, 30
    %v1077 = vpop.permute.xlu0 %1076
    %v1078 = vsel %vm782, %v1073, %v1075
    %v1079 = vsel %vm782, %v1075, %v1077
    %v1080 = vsel %vm782, %v1077, %v1070
    %v1085 = vsel %vm782, %v1070, %v1073
    %v1086 = vmul.f32 %v1085, %v791
    %v1087 = vmul.f32 %v1078, %v792
    %v1088 = vmul.f32 %v1079, %v793
    %v1089 = vmul.f32 %v1080, %v794
    %1090 = vrot.lane.b32.xlu0 %v1022, 2
    %v1091 = vpop.permute.xlu0 %1090
    %1093 = vrot.lane.b32.xlu0 %v1019, 2
    %v1094 = vpop.permute.xlu0 %1093
    %1095 = vrot.lane.b32.xlu0 %v1020, 2
    %v1096 = vpop.permute.xlu0 %1095
    %1097 = vrot.lane.b32.xlu0 %v1021, 2
    %v1098 = vpop.permute.xlu0 %1097
    %v1099 = vsel %vm808, %v1094, %v1096
    %v1100 = vsel %vm808, %v1096, %v1098
    %v1101 = vsel %vm808, %v1098, %v1091
    %v1106 = vsel %vm808, %v1091, %v1094
    %v1107 = vmul.f32 %v1106, %v817
    %v1108 = vmul.f32 %v1099, %v818
    %v1109 = vmul.f32 %v1100, %v819
    %v1110 = vmul.f32 %v1101, %v820
    %1111 = vrot.lane.b32.xlu0 %v1019, 126
    %v1112 = vpop.permute.xlu0 %1111
    %1113 = vrot.lane.b32.xlu0 %v1020, 126
    %v1114 = vpop.permute.xlu0 %1113
    %1115 = vrot.lane.b32.xlu0 %v1021, 126
    %v1116 = vpop.permute.xlu0 %1115
    %1117 = vrot.lane.b32.xlu0 %v1022, 126
    %v1118 = vpop.permute.xlu0 %1117
    %v1119 = vsel %vm833, %v1112, %v1114
    %v1120 = vsel %vm833, %v1114, %v1116
    %v1121 = vsel %vm833, %v1116, %v1118
    %v1127 = vsel %vm833, %v1118, %v1112
    %v1128 = vmul.f32 %v1119, %v843
    %v1129 = vmul.f32 %v1120, %v844
    %v1130 = vmul.f32 %v1121, %v845
    %v1131 = vmul.f32 %v1127, %v846
    %1132 = vrot.lane.b32.xlu0 %v1019, 98
    %v1133 = vpop.permute.xlu0 %1132
    %1134 = vrot.lane.b32.xlu0 %v1020, 98
    %v1135 = vpop.permute.xlu0 %1134
    %1136 = vrot.lane.b32.xlu0 %v1021, 98
    %v1137 = vpop.permute.xlu0 %1136
    %1138 = vrot.lane.b32.xlu0 %v1022, 98
    %v1139 = vpop.permute.xlu0 %1138
    %v1140 = vsel %vm859, %v1133, %v1135
    %v1141 = vsel %vm859, %v1135, %v1137
    %v1142 = vsel %vm859, %v1137, %v1139
    %v1148 = vsel %vm859, %v1139, %v1133
    %v1149 = vmul.f32 %v1140, %v869
    %v1150 = vmul.f32 %v1141, %v870
    %v1151 = vmul.f32 %v1142, %v871
    %v1152 = vmul.f32 %v1148, %v872
    %1153 = vrot.lane.b32.xlu0 %v1019, 96
    %v1154 = vpop.permute.xlu0 %1153
    %1155 = vrot.lane.b32.xlu0 %v1020, 96
    %v1156 = vpop.permute.xlu0 %1155
    %1157 = vrot.lane.b32.xlu0 %v1021, 96
    %v1158 = vpop.permute.xlu0 %1157
    %1159 = vrot.lane.b32.xlu0 %v1022, 96
    %v1160 = vpop.permute.xlu0 %1159
    %v1161 = vsel %vm885, %v1154, %v1156
    %v1162 = vsel %vm885, %v1156, %v1158
    %v1163 = vsel %vm885, %v1158, %v1160
    %v1169 = vsel %vm885, %v1160, %v1154
    %v1170 = vmul.f32 %v1161, %v895
    %v1171 = vmul.f32 %v1162, %v896
    %v1172 = vmul.f32 %v1163, %v897
    %v1173 = vmul.f32 %v1169, %v898
    %1174 = vrot.lane.b32.xlu0 %v1019, 94
    %v1175 = vpop.permute.xlu0 %1174
    %1176 = vrot.lane.b32.xlu0 %v1020, 94
    %v1177 = vpop.permute.xlu0 %1176
    %1178 = vrot.lane.b32.xlu0 %v1021, 94
    %v1179 = vpop.permute.xlu0 %1178
    %1180 = vrot.lane.b32.xlu0 %v1022, 94
    %v1181 = vpop.permute.xlu0 %1180
    %v1182 = vsel %vm911, %v1175, %v1177
    %v1183 = vsel %vm911, %v1177, %v1179
    %v1184 = vsel %vm911, %v1179, %v1181
    %v1190 = vsel %vm911, %v1181, %v1175
    %v1191 = vmul.f32 %v1182, %v921
    %v1192 = vmul.f32 %v1183, %v922
    %v1193 = vmul.f32 %v1184, %v923
    %v1194 = vmul.f32 %v1190, %v924
    %v1195 = vld [vmem:[%s7] sm:$0xff]
    %v1196 = vld [vmem:[%s8] sm:$0xff]
    %1198 = vset.pattern.permute.xlu0 0
    %1199 = vperm.xlu0 %1198, %v1196
    %v1200 = vpop.permute.xlu0 %1199
    %v1203 = vsel %vm345, %v1195, 0
    %1205 = vmatpush.msra.mxu0 0.0
    %1206 = vmatpush.msra.mxu0 0.0
    %1207 = vmatpush.msra.mxu0 0.0
    %1208 = vmatpush.msra.mxu0 0.0
    %1209 = vmatpush.msra.mxu0 0.0
    %1210 = vmatpush.msra.mxu0 0.0
    %1211 = vmatpush.msra.mxu0 0.0
    %1212 = vmatpush.msra.mxu0 %v1191
    %1213 = vmatpush.msra.mxu0 %v1170
    %1214 = vmatpush.msra.mxu0 %v1149
    %1215 = vmatpush.msra.mxu0 %v1128
    %1216 = vmatpush.msra.mxu0 %v1019
    %1217 = vmatpush.msra.mxu0 %v1107
    %1218 = vmatpush.msra.mxu0 %v1086
    %1219 = vmatpush.msra.mxu0 %v1065
    %1220 = vmatpush.msra.mxu0 %v1044
    %1221 = vmatmul.f32.gmra.mxu0 %v1203
    %v1222 = vpop.f32.mrf.mxu0
    %v1223 = vadd.f32 %v1200, %v1222
    %1224 = vdwg.mxu0
    %1225 = vmatpush.msra.mxu0 0.0
    %1226 = vmatpush.msra.mxu0 0.0
    %1227 = vmatpush.msra.mxu0 0.0
    %1228 = vmatpush.msra.mxu0 0.0
    %1229 = vmatpush.msra.mxu0 0.0
    %1230 = vmatpush.msra.mxu0 0.0
    %1231 = vmatpush.msra.mxu0 0.0
    %1232 = vmatpush.msra.mxu0 %v1192
    %1233 = vmatpush.msra.mxu0 %v1171
    %1234 = vmatpush.msra.mxu0 %v1150
    %1235 = vmatpush.msra.mxu0 %v1129
    %1236 = vmatpush.msra.mxu0 %v1020
    %1237 = vmatpush.msra.mxu0 %v1108
    %1238 = vmatpush.msra.mxu0 %v1087
    %1239 = vmatpush.msra.mxu0 %v1066
    %1240 = vmatpush.msra.mxu0 %v1045
    %1241 = vmatmul.f32.gmra.mxu0 %v1203
    %v1242 = vpop.f32.mrf.mxu0
    %v1243 = vadd.f32 %v1200, %v1242
    %1244 = vdwg.mxu0
    %1245 = vmatpush.msra.mxu0 0.0
    %1246 = vmatpush.msra.mxu0 0.0
    %1247 = vmatpush.msra.mxu0 0.0
    %1248 = vmatpush.msra.mxu0 0.0
    %1249 = vmatpush.msra.mxu0 0.0
    %1250 = vmatpush.msra.mxu0 0.0
    %1251 = vmatpush.msra.mxu0 0.0
    %1252 = vmatpush.msra.mxu0 %v1193
    %1253 = vmatpush.msra.mxu0 %v1172
    %1254 = vmatpush.msra.mxu0 %v1151
    %1255 = vmatpush.msra.mxu0 %v1130
    %1256 = vmatpush.msra.mxu0 %v1021
    %1257 = vmatpush.msra.mxu0 %v1109
    %1258 = vmatpush.msra.mxu0 %v1088
    %1259 = vmatpush.msra.mxu0 %v1067
    %1260 = vmatpush.msra.mxu0 %v1046
    %1261 = vmatmul.f32.gmra.mxu0 %v1203
    %v1262 = vpop.f32.mrf.mxu0
    %v1263 = vadd.f32 %v1200, %v1262
    %1264 = vdwg.mxu0
    %1265 = vmatpush.msra.mxu0 0.0
    %1266 = vmatpush.msra.mxu0 0.0
    %1267 = vmatpush.msra.mxu0 0.0
    %1268 = vmatpush.msra.mxu0 0.0
    %1269 = vmatpush.msra.mxu0 0.0
    %1270 = vmatpush.msra.mxu0 0.0
    %1271 = vmatpush.msra.mxu0 0.0
    %1272 = vmatpush.msra.mxu0 %v1194
    %1273 = vmatpush.msra.mxu0 %v1173
    %1274 = vmatpush.msra.mxu0 %v1152
    %1275 = vmatpush.msra.mxu0 %v1131
    %1276 = vmatpush.msra.mxu0 %v1022
    %1277 = vmatpush.msra.mxu0 %v1110
    %1278 = vmatpush.msra.mxu0 %v1089
    %1279 = vmatpush.msra.mxu0 %v1068
    %1280 = vmatpush.msra.mxu0 %v1047
    %1281 = vmatmul.f32.gmra.mxu0 %v1203
    %v1282 = vpop.f32.mrf.mxu0
    %v1283 = vadd.f32 %v1200, %v1282
    %1284 = vdwg.mxu0
    %s1285 = sld [smem:[#allocation9]]
    %v1286 = vstv %s1285
    %v1287 = vmul.f32 %v1223, %v1286
    %v1288 = vmul.f32 %v1243, %v1286
    %v1289 = vmul.f32 %v1263, %v1286
    %v1290 = vmul.f32 %v1283, %v1286
    %v1291 = vadd.f32 %v709, %v1287
    %v1292 = vadd.f32 %v710, %v1288
    %v1293 = vadd.f32 %v711, %v1289
    %v1294 = vadd.f32 %v712, %v1290
    %v1295 = vmax.f32 %v1291, 0.0
    %v1296 = vmax.f32 %v1292, 0.0
    %v1297 = vmax.f32 %v1293, 0.0
    %v1298 = vmax.f32 %v1294, 0.0
    %1300 = vrot.lane.b32.xlu0 %v1298, 34
    %v1301 = vpop.permute.xlu0 %1300
    %1306 = vrot.lane.b32.xlu0 %v1295, 34
    %v1307 = vpop.permute.xlu0 %1306
    %1308 = vrot.lane.b32.xlu0 %v1296, 34
    %v1309 = vpop.permute.xlu0 %1308
    %1310 = vrot.lane.b32.xlu0 %v1297, 34
    %v1311 = vpop.permute.xlu0 %1310
    %v1312 = vsel %vm730, %v1307, %v1309
    %v1313 = vsel %vm730, %v1309, %v1311
    %v1314 = vsel %vm730, %v1311, %v1301
    %v1319 = vsel %vm730, %v1301, %v1307
    %v1320 = vmul.f32 %v1319, %v739
    %v1321 = vmul.f32 %v1312, %v740
    %v1322 = vmul.f32 %v1313, %v741
    %v1323 = vmul.f32 %v1314, %v742
    %1324 = vrot.lane.b32.xlu0 %v1298, 32
    %v1325 = vpop.permute.xlu0 %1324
    %1327 = vrot.lane.b32.xlu0 %v1295, 32
    %v1328 = vpop.permute.xlu0 %1327
    %1329 = vrot.lane.b32.xlu0 %v1296, 32
    %v1330 = vpop.permute.xlu0 %1329
    %1331 = vrot.lane.b32.xlu0 %v1297, 32
    %v1332 = vpop.permute.xlu0 %1331
    %v1333 = vsel %vm756, %v1328, %v1330
    %v1334 = vsel %vm756, %v1330, %v1332
    %v1335 = vsel %vm756, %v1332, %v1325
    %v1340 = vsel %vm756, %v1325, %v1328
    %v1341 = vmul.f32 %v1340, %v765
    %v1342 = vmul.f32 %v1333, %v766
    %v1343 = vmul.f32 %v1334, %v767
    %v1344 = vmul.f32 %v1335, %v768
    %1345 = vrot.lane.b32.xlu0 %v1298, 30
    %v1346 = vpop.permute.xlu0 %1345
    %1348 = vrot.lane.b32.xlu0 %v1295, 30
    %v1349 = vpop.permute.xlu0 %1348
    %1350 = vrot.lane.b32.xlu0 %v1296, 30
    %v1351 = vpop.permute.xlu0 %1350
    %1352 = vrot.lane.b32.xlu0 %v1297, 30
    %v1353 = vpop.permute.xlu0 %1352
    %v1354 = vsel %vm782, %v1349, %v1351
    %v1355 = vsel %vm782, %v1351, %v1353
    %v1356 = vsel %vm782, %v1353, %v1346
    %v1361 = vsel %vm782, %v1346, %v1349
    %v1362 = vmul.f32 %v1361, %v791
    %v1363 = vmul.f32 %v1354, %v792
    %v1364 = vmul.f32 %v1355, %v793
    %v1365 = vmul.f32 %v1356, %v794
    %1366 = vrot.lane.b32.xlu0 %v1298, 2
    %v1367 = vpop.permute.xlu0 %1366
    %1369 = vrot.lane.b32.xlu0 %v1295, 2
    %v1370 = vpop.permute.xlu0 %1369
    %1371 = vrot.lane.b32.xlu0 %v1296, 2
    %v1372 = vpop.permute.xlu0 %1371
    %1373 = vrot.lane.b32.xlu0 %v1297, 2
    %v1374 = vpop.permute.xlu0 %1373
    %v1375 = vsel %vm808, %v1370, %v1372
    %v1376 = vsel %vm808, %v1372, %v1374
    %v1377 = vsel %vm808, %v1374, %v1367
    %v1382 = vsel %vm808, %v1367, %v1370
    %v1383 = vmul.f32 %v1382, %v817
    %v1384 = vmul.f32 %v1375, %v818
    %v1385 = vmul.f32 %v1376, %v819
    %v1386 = vmul.f32 %v1377, %v820
    %1387 = vrot.lane.b32.xlu0 %v1295, 126
    %v1388 = vpop.permute.xlu0 %1387
    %1389 = vrot.lane.b32.xlu0 %v1296, 126
    %v1390 = vpop.permute.xlu0 %1389
    %1391 = vrot.lane.b32.xlu0 %v1297, 126
    %v1392 = vpop.permute.xlu0 %1391
    %1393 = vrot.lane.b32.xlu0 %v1298, 126
    %v1394 = vpop.permute.xlu0 %1393
    %v1395 = vsel %vm833, %v1388, %v1390
    %v1396 = vsel %vm833, %v1390, %v1392
    %v1397 = vsel %vm833, %v1392, %v1394
    %v1403 = vsel %vm833, %v1394, %v1388
    %v1404 = vmul.f32 %v1395, %v843
    %v1405 = vmul.f32 %v1396, %v844
    %v1406 = vmul.f32 %v1397, %v845
    %v1407 = vmul.f32 %v1403, %v846
    %1408 = vrot.lane.b32.xlu0 %v1295, 98
    %v1409 = vpop.permute.xlu0 %1408
    %1410 = vrot.lane.b32.xlu0 %v1296, 98
    %v1411 = vpop.permute.xlu0 %1410
    %1412 = vrot.lane.b32.xlu0 %v1297, 98
    %v1413 = vpop.permute.xlu0 %1412
    %1414 = vrot.lane.b32.xlu0 %v1298, 98
    %v1415 = vpop.permute.xlu0 %1414
    %v1416 = vsel %vm859, %v1409, %v1411
    %v1417 = vsel %vm859, %v1411, %v1413
    %v1418 = vsel %vm859, %v1413, %v1415
    %v1424 = vsel %vm859, %v1415, %v1409
    %v1425 = vmul.f32 %v1416, %v869
    %v1426 = vmul.f32 %v1417, %v870
    %v1427 = vmul.f32 %v1418, %v871
    %v1428 = vmul.f32 %v1424, %v872
    %1429 = vrot.lane.b32.xlu0 %v1295, 96
    %v1430 = vpop.permute.xlu0 %1429
    %1431 = vrot.lane.b32.xlu0 %v1296, 96
    %v1432 = vpop.permute.xlu0 %1431
    %1433 = vrot.lane.b32.xlu0 %v1297, 96
    %v1434 = vpop.permute.xlu0 %1433
    %1435 = vrot.lane.b32.xlu0 %v1298, 96
    %v1436 = vpop.permute.xlu0 %1435
    %v1437 = vsel %vm885, %v1430, %v1432
    %v1438 = vsel %vm885, %v1432, %v1434
    %v1439 = vsel %vm885, %v1434, %v1436
    %v1445 = vsel %vm885, %v1436, %v1430
    %v1446 = vmul.f32 %v1437, %v895
    %v1447 = vmul.f32 %v1438, %v896
    %v1448 = vmul.f32 %v1439, %v897
    %v1449 = vmul.f32 %v1445, %v898
    %1450 = vrot.lane.b32.xlu0 %v1295, 94
    %v1451 = vpop.permute.xlu0 %1450
    %1452 = vrot.lane.b32.xlu0 %v1296, 94
    %v1453 = vpop.permute.xlu0 %1452
    %1454 = vrot.lane.b32.xlu0 %v1297, 94
    %v1455 = vpop.permute.xlu0 %1454
    %1456 = vrot.lane.b32.xlu0 %v1298, 94
    %v1457 = vpop.permute.xlu0 %1456
    %v1458 = vsel %vm911, %v1451, %v1453
    %v1459 = vsel %vm911, %v1453, %v1455
    %v1460 = vsel %vm911, %v1455, %v1457
    %v1466 = vsel %vm911, %v1457, %v1451
    %v1467 = vmul.f32 %v1458, %v921
    %v1468 = vmul.f32 %v1459, %v922
    %v1469 = vmul.f32 %v1460, %v923
    %v1470 = vmul.f32 %v1466, %v924
    %v1471 = vld [vmem:[%s9] sm:$0xff]
    %v1472 = vld [vmem:[%s10] sm:$0xff]
    %1474 = vset.pattern.permute.xlu0 0
    %1475 = vperm.xlu0 %1474, %v1472
    %v1476 = vpop.permute.xlu0 %1475
    %v1479 = vsel %vm345, %v1471, 0
    %1481 = vmatpush.msra.mxu0 0.0
    %1482 = vmatpush.msra.mxu0 0.0
    %1483 = vmatpush.msra.mxu0 0.0
    %1484 = vmatpush.msra.mxu0 0.0
    %1485 = vmatpush.msra.mxu0 0.0
    %1486 = vmatpush.msra.mxu0 0.0
    %1487 = vmatpush.msra.mxu0 0.0
    %1488 = vmatpush.msra.mxu0 %v1467
    %1489 = vmatpush.msra.mxu0 %v1446
    %1490 = vmatpush.msra.mxu0 %v1425
    %1491 = vmatpush.msra.mxu0 %v1404
    %1492 = vmatpush.msra.mxu0 %v1295
    %1493 = vmatpush.msra.mxu0 %v1383
    %1494 = vmatpush.msra.mxu0 %v1362
    %1495 = vmatpush.msra.mxu0 %v1341
    %1496 = vmatpush.msra.mxu0 %v1320
    %1497 = vmatmul.f32.gmra.mxu0 %v1479
    %v1498 = vpop.f32.mrf.mxu0
    %v1499 = vadd.f32 %v1476, %v1498
    %1500 = vdwg.mxu0
    %1501 = vmatpush.msra.mxu0 0.0
    %1502 = vmatpush.msra.mxu0 0.0
    %1503 = vmatpush.msra.mxu0 0.0
    %1504 = vmatpush.msra.mxu0 0.0
    %1505 = vmatpush.msra.mxu0 0.0
    %1506 = vmatpush.msra.mxu0 0.0
    %1507 = vmatpush.msra.mxu0 0.0
    %1508 = vmatpush.msra.mxu0 %v1468
    %1509 = vmatpush.msra.mxu0 %v1447
    %1510 = vmatpush.msra.mxu0 %v1426
    %1511 = vmatpush.msra.mxu0 %v1405
    %1512 = vmatpush.msra.mxu0 %v1296
    %1513 = vmatpush.msra.mxu0 %v1384
    %1514 = vmatpush.msra.mxu0 %v1363
    %1515 = vmatpush.msra.mxu0 %v1342
    %1516 = vmatpush.msra.mxu0 %v1321
    %1517 = vmatmul.f32.gmra.mxu0 %v1479
    %v1518 = vpop.f32.mrf.mxu0
    %v1519 = vadd.f32 %v1476, %v1518
    %1520 = vdwg.mxu0
    %1521 = vmatpush.msra.mxu0 0.0
    %1522 = vmatpush.msra.mxu0 0.0
    %1523 = vmatpush.msra.mxu0 0.0
    %1524 = vmatpush.msra.mxu0 0.0
    %1525 = vmatpush.msra.mxu0 0.0
    %1526 = vmatpush.msra.mxu0 0.0
    %1527 = vmatpush.msra.mxu0 0.0
    %1528 = vmatpush.msra.mxu0 %v1469
    %1529 = vmatpush.msra.mxu0 %v1448
    %1530 = vmatpush.msra.mxu0 %v1427
    %1531 = vmatpush.msra.mxu0 %v1406
    %1532 = vmatpush.msra.mxu0 %v1297
    %1533 = vmatpush.msra.mxu0 %v1385
    %1534 = vmatpush.msra.mxu0 %v1364
    %1535 = vmatpush.msra.mxu0 %v1343
    %1536 = vmatpush.msra.mxu0 %v1322
    %1537 = vmatmul.f32.gmra.mxu0 %v1479
    %v1538 = vpop.f32.mrf.mxu0
    %v1539 = vadd.f32 %v1476, %v1538
    %1540 = vdwg.mxu0
    %1541 = vmatpush.msra.mxu0 0.0
    %1542 = vmatpush.msra.mxu0 0.0
    %1543 = vmatpush.msra.mxu0 0.0
    %1544 = vmatpush.msra.mxu0 0.0
    %1545 = vmatpush.msra.mxu0 0.0
    %1546 = vmatpush.msra.mxu0 0.0
    %1547 = vmatpush.msra.mxu0 0.0
    %1548 = vmatpush.msra.mxu0 %v1470
    %1549 = vmatpush.msra.mxu0 %v1449
    %1550 = vmatpush.msra.mxu0 %v1428
    %1551 = vmatpush.msra.mxu0 %v1407
    %1552 = vmatpush.msra.mxu0 %v1298
    %1553 = vmatpush.msra.mxu0 %v1386
    %1554 = vmatpush.msra.mxu0 %v1365
    %1555 = vmatpush.msra.mxu0 %v1344
    %1556 = vmatpush.msra.mxu0 %v1323
    %1557 = vmatmul.f32.gmra.mxu0 %v1479
    %v1558 = vpop.f32.mrf.mxu0
    %v1559 = vadd.f32 %v1476, %v1558
    %1560 = vdwg.mxu0
    %v1561 = vmax.f32 %v1499, 0.0
    %v1562 = vmax.f32 %v1519, 0.0
    %v1563 = vmax.f32 %v1539, 0.0
    %v1564 = vmax.f32 %v1559, 0.0
    %1566 = vrot.lane.b32.xlu0 %v1564, 34
    %v1567 = vpop.permute.xlu0 %1566
    %1572 = vrot.lane.b32.xlu0 %v1561, 34
    %v1573 = vpop.permute.xlu0 %1572
    %1574 = vrot.lane.b32.xlu0 %v1562, 34
    %v1575 = vpop.permute.xlu0 %1574
    %1576 = vrot.lane.b32.xlu0 %v1563, 34
    %v1577 = vpop.permute.xlu0 %1576
    %v1578 = vsel %vm730, %v1573, %v1575
    %v1579 = vsel %vm730, %v1575, %v1577
    %v1580 = vsel %vm730, %v1577, %v1567
    %v1585 = vsel %vm730, %v1567, %v1573
    %v1586 = vmul.f32 %v1585, %v739
    %v1587 = vmul.f32 %v1578, %v740
    %v1588 = vmul.f32 %v1579, %v741
    %v1589 = vmul.f32 %v1580, %v742
    %1590 = vrot.lane.b32.xlu0 %v1564, 32
    %v1591 = vpop.permute.xlu0 %1590
    %1593 = vrot.lane.b32.xlu0 %v1561, 32
    %v1594 = vpop.permute.xlu0 %1593
    %1595 = vrot.lane.b32.xlu0 %v1562, 32
    %v1596 = vpop.permute.xlu0 %1595
    %1597 = vrot.lane.b32.xlu0 %v1563, 32
    %v1598 = vpop.permute.xlu0 %1597
    %v1599 = vsel %vm756, %v1594, %v1596
    %v1600 = vsel %vm756, %v1596, %v1598
    %v1601 = vsel %vm756, %v1598, %v1591
    %v1606 = vsel %vm756, %v1591, %v1594
    %v1607 = vmul.f32 %v1606, %v765
    %v1608 = vmul.f32 %v1599, %v766
    %v1609 = vmul.f32 %v1600, %v767
    %v1610 = vmul.f32 %v1601, %v768
    %1611 = vrot.lane.b32.xlu0 %v1564, 30
    %v1612 = vpop.permute.xlu0 %1611
    %1614 = vrot.lane.b32.xlu0 %v1561, 30
    %v1615 = vpop.permute.xlu0 %1614
    %1616 = vrot.lane.b32.xlu0 %v1562, 30
    %v1617 = vpop.permute.xlu0 %1616
    %1618 = vrot.lane.b32.xlu0 %v1563, 30
    %v1619 = vpop.permute.xlu0 %1618
    %v1620 = vsel %vm782, %v1615, %v1617
    %v1621 = vsel %vm782, %v1617, %v1619
    %v1622 = vsel %vm782, %v1619, %v1612
    %v1627 = vsel %vm782, %v1612, %v1615
    %v1628 = vmul.f32 %v1627, %v791
    %v1629 = vmul.f32 %v1620, %v792
    %v1630 = vmul.f32 %v1621, %v793
    %v1631 = vmul.f32 %v1622, %v794
    %1632 = vrot.lane.b32.xlu0 %v1564, 2
    %v1633 = vpop.permute.xlu0 %1632
    %1635 = vrot.lane.b32.xlu0 %v1561, 2
    %v1636 = vpop.permute.xlu0 %1635
    %1637 = vrot.lane.b32.xlu0 %v1562, 2
    %v1638 = vpop.permute.xlu0 %1637
    %1639 = vrot.lane.b32.xlu0 %v1563, 2
    %v1640 = vpop.permute.xlu0 %1639
    %v1641 = vsel %vm808, %v1636, %v1638
    %v1642 = vsel %vm808, %v1638, %v1640
    %v1643 = vsel %vm808, %v1640, %v1633
    %v1648 = vsel %vm808, %v1633, %v1636
    %v1649 = vmul.f32 %v1648, %v817
    %v1650 = vmul.f32 %v1641, %v818
    %v1651 = vmul.f32 %v1642, %v819
    %v1652 = vmul.f32 %v1643, %v820
    %1653 = vrot.lane.b32.xlu0 %v1561, 126
    %v1654 = vpop.permute.xlu0 %1653
    %1655 = vrot.lane.b32.xlu0 %v1562, 126
    %v1656 = vpop.permute.xlu0 %1655
    %1657 = vrot.lane.b32.xlu0 %v1563, 126
    %v1658 = vpop.permute.xlu0 %1657
    %1659 = vrot.lane.b32.xlu0 %v1564, 126
    %v1660 = vpop.permute.xlu0 %1659
    %v1661 = vsel %vm833, %v1654, %v1656
    %v1662 = vsel %vm833, %v1656, %v1658
    %v1663 = vsel %vm833, %v1658, %v1660
    %v1669 = vsel %vm833, %v1660, %v1654
    %v1670 = vmul.f32 %v1661, %v843
    %v1671 = vmul.f32 %v1662, %v844
    %v1672 = vmul.f32 %v1663, %v845
    %v1673 = vmul.f32 %v1669, %v846
    %1674 = vrot.lane.b32.xlu0 %v1561, 98
    %v1675 = vpop.permute.xlu0 %1674
    %1676 = vrot.lane.b32.xlu0 %v1562, 98
    %v1677 = vpop.permute.xlu0 %1676
    %1678 = vrot.lane.b32.xlu0 %v1563, 98
    %v1679 = vpop.permute.xlu0 %1678
    %1680 = vrot.lane.b32.xlu0 %v1564, 98
    %v1681 = vpop.permute.xlu0 %1680
    %v1682 = vsel %vm859, %v1675, %v1677
    %v1683 = vsel %vm859, %v1677, %v1679
    %v1684 = vsel %vm859, %v1679, %v1681
    %v1690 = vsel %vm859, %v1681, %v1675
    %v1691 = vmul.f32 %v1682, %v869
    %v1692 = vmul.f32 %v1683, %v870
    %v1693 = vmul.f32 %v1684, %v871
    %v1694 = vmul.f32 %v1690, %v872
    %1695 = vrot.lane.b32.xlu0 %v1561, 96
    %v1696 = vpop.permute.xlu0 %1695
    %1697 = vrot.lane.b32.xlu0 %v1562, 96
    %v1698 = vpop.permute.xlu0 %1697
    %1699 = vrot.lane.b32.xlu0 %v1563, 96
    %v1700 = vpop.permute.xlu0 %1699
    %1701 = vrot.lane.b32.xlu0 %v1564, 96
    %v1702 = vpop.permute.xlu0 %1701
    %v1703 = vsel %vm885, %v1696, %v1698
    %v1704 = vsel %vm885, %v1698, %v1700
    %v1705 = vsel %vm885, %v1700, %v1702
    %v1711 = vsel %vm885, %v1702, %v1696
    %v1712 = vmul.f32 %v1703, %v895
    %v1713 = vmul.f32 %v1704, %v896
    %v1714 = vmul.f32 %v1705, %v897
    %v1715 = vmul.f32 %v1711, %v898
    %1716 = vrot.lane.b32.xlu0 %v1561, 94
    %v1717 = vpop.permute.xlu0 %1716
    %1718 = vrot.lane.b32.xlu0 %v1562, 94
    %v1719 = vpop.permute.xlu0 %1718
    %1720 = vrot.lane.b32.xlu0 %v1563, 94
    %v1721 = vpop.permute.xlu0 %1720
    %1722 = vrot.lane.b32.xlu0 %v1564, 94
    %v1723 = vpop.permute.xlu0 %1722
    %v1724 = vsel %vm911, %v1717, %v1719
    %v1725 = vsel %vm911, %v1719, %v1721
    %v1726 = vsel %vm911, %v1721, %v1723
    %v1732 = vsel %vm911, %v1723, %v1717
    %v1733 = vmul.f32 %v1724, %v921
    %v1734 = vmul.f32 %v1725, %v922
    %v1735 = vmul.f32 %v1726, %v923
    %v1736 = vmul.f32 %v1732, %v924
    %v1737 = vld [vmem:[%s11] sm:$0xff]
    %v1738 = vld [vmem:[%s12] sm:$0xff]
    %1740 = vset.pattern.permute.xlu0 0
    %1741 = vperm.xlu0 %1740, %v1738
    %v1742 = vpop.permute.xlu0 %1741
    %v1745 = vsel %vm345, %v1737, 0
    %1747 = vmatpush.msra.mxu0 0.0
    %1748 = vmatpush.msra.mxu0 0.0
    %1749 = vmatpush.msra.mxu0 0.0
    %1750 = vmatpush.msra.mxu0 0.0
    %1751 = vmatpush.msra.mxu0 0.0
    %1752 = vmatpush.msra.mxu0 0.0
    %1753 = vmatpush.msra.mxu0 0.0
    %1754 = vmatpush.msra.mxu0 %v1733
    %1755 = vmatpush.msra.mxu0 %v1712
    %1756 = vmatpush.msra.mxu0 %v1691
    %1757 = vmatpush.msra.mxu0 %v1670
    %1758 = vmatpush.msra.mxu0 %v1561
    %1759 = vmatpush.msra.mxu0 %v1649
    %1760 = vmatpush.msra.mxu0 %v1628
    %1761 = vmatpush.msra.mxu0 %v1607
    %1762 = vmatpush.msra.mxu0 %v1586
    %1763 = vmatmul.f32.gmra.mxu0 %v1745
    %v1764 = vpop.f32.mrf.mxu0
    %v1765 = vadd.f32 %v1742, %v1764
    %1766 = vdwg.mxu0
    %1767 = vmatpush.msra.mxu0 0.0
    %1768 = vmatpush.msra.mxu0 0.0
    %1769 = vmatpush.msra.mxu0 0.0
    %1770 = vmatpush.msra.mxu0 0.0
    %1771 = vmatpush.msra.mxu0 0.0
    %1772 = vmatpush.msra.mxu0 0.0
    %1773 = vmatpush.msra.mxu0 0.0
    %1774 = vmatpush.msra.mxu0 %v1734
    %1775 = vmatpush.msra.mxu0 %v1713
    %1776 = vmatpush.msra.mxu0 %v1692
    %1777 = vmatpush.msra.mxu0 %v1671
    %1778 = vmatpush.msra.mxu0 %v1562
    %1779 = vmatpush.msra.mxu0 %v1650
    %1780 = vmatpush.msra.mxu0 %v1629
    %1781 = vmatpush.msra.mxu0 %v1608
    %1782 = vmatpush.msra.mxu0 %v1587
    %1783 = vmatmul.f32.gmra.mxu0 %v1745
    %v1784 = vpop.f32.mrf.mxu0
    %v1785 = vadd.f32 %v1742, %v1784
    %1786 = vdwg.mxu0
    %1787 = vmatpush.msra.mxu0 0.0
    %1788 = vmatpush.msra.mxu0 0.0
    %1789 = vmatpush.msra.mxu0 0.0
    %1790 = vmatpush.msra.mxu0 0.0
    %1791 = vmatpush.msra.mxu0 0.0
    %1792 = vmatpush.msra.mxu0 0.0
    %1793 = vmatpush.msra.mxu0 0.0
    %1794 = vmatpush.msra.mxu0 %v1735
    %1795 = vmatpush.msra.mxu0 %v1714
    %1796 = vmatpush.msra.mxu0 %v1693
    %1797 = vmatpush.msra.mxu0 %v1672
    %1798 = vmatpush.msra.mxu0 %v1563
    %1799 = vmatpush.msra.mxu0 %v1651
    %1800 = vmatpush.msra.mxu0 %v1630
    %1801 = vmatpush.msra.mxu0 %v1609
    %1802 = vmatpush.msra.mxu0 %v1588
    %1803 = vmatmul.f32.gmra.mxu0 %v1745
    %v1804 = vpop.f32.mrf.mxu0
    %v1805 = vadd.f32 %v1742, %v1804
    %1806 = vdwg.mxu0
    %1807 = vmatpush.msra.mxu0 0.0
    %1808 = vmatpush.msra.mxu0 0.0
    %1809 = vmatpush.msra.mxu0 0.0
    %1810 = vmatpush.msra.mxu0 0.0
    %1811 = vmatpush.msra.mxu0 0.0
    %1812 = vmatpush.msra.mxu0 0.0
    %1813 = vmatpush.msra.mxu0 0.0
    %1814 = vmatpush.msra.mxu0 %v1736
    %1815 = vmatpush.msra.mxu0 %v1715
    %1816 = vmatpush.msra.mxu0 %v1694
    %1817 = vmatpush.msra.mxu0 %v1673
    %1818 = vmatpush.msra.mxu0 %v1564
    %1819 = vmatpush.msra.mxu0 %v1652
    %1820 = vmatpush.msra.mxu0 %v1631
    %1821 = vmatpush.msra.mxu0 %v1610
    %1822 = vmatpush.msra.mxu0 %v1589
    %1823 = vmatmul.f32.gmra.mxu0 %v1745
    %v1824 = vpop.f32.mrf.mxu0
    %v1825 = vadd.f32 %v1742, %v1824
    %1826 = vdwg.mxu0
    %s1827 = sld [smem:[#allocation9 + $0x1]]
    %v1828 = vstv %s1827
    %v1829 = vmul.f32 %v1765, %v1828
    %v1830 = vmul.f32 %v1785, %v1828
    %v1831 = vmul.f32 %v1805, %v1828
    %v1832 = vmul.f32 %v1825, %v1828
    %v1833 = vadd.f32 %v1291, %v1829
    %v1834 = vadd.f32 %v1292, %v1830
    %v1835 = vadd.f32 %v1293, %v1831
    %v1836 = vadd.f32 %v1294, %v1832
    %1837 = vst [vmem:[#allocation10] sm:$0xff] %v1833
    %1838 = vst [vmem:[#allocation10 + $0x8] sm:$0xff] %v1834
    %1839 = vst [vmem:[#allocation10 + $0x10] sm:$0xff] %v1835
    %1840 = vst [vmem:[#allocation10 + $0x18] sm:$0xff] %v1836
    // Predicated region
    $region74: #{tpu_custom_call.1} parent=1 // pred_check
      _
    $region75: #{tpu_custom_call.1} parent=1 // pred_check_branch
      %1842 = sbr.rel (0) target = $region77
    $region76: #{tpu_custom_call.1} parent=1 // pred_region
      %1844 = vsyncadd [#allocation4], 0
      %s1846 = sshll.u32 [#allocation10], 4
      %s1847 = int_to_ptr.vmem [resolvable:$true] %s1846
      %s1848 = sshll.u32 %s14, 4
      %s1849 = int_to_ptr.hbm [resolvable:$true] %s1848
      %1851 = dma.vmem_to_hbm [thread:$0]  %s1847, 512, %s1849, [#allocation4]
    $region77: #{tpu_custom_call.1} parent=1 // pred_fallthru
      _
    // Predicated region
    $region78: #{tpu_custom_call.1} parent=1 // pred_check
      _
    $region79: #{tpu_custom_call.1} parent=1 // pred_check_branch
      %1853 = sbr.rel (0) target = $region81
    $region80: #{tpu_custom_call.1} parent=1 // pred_region
      %1855 = dma.done [#allocation4], 512
    $region81: #{tpu_custom_call.1} parent=1 // pred_fallthru
      _
    %1856 = vsyncpa [#allocation3], 1
    %1857 = vsyncpa [#allocation7], 1
    %1858 = vsyncpa [#allocation4], 1
    %1859 = vsyncpa [#allocation5], 1

</llo_original>
